<compile_context>
chip_gen: v5e
topology: v5e:2x2
jax: 0.10.0
libtpu: 0.0.40
codegen_flags: <defaults>
</compile_context>

<pallas_src>
import math

import jax
import jax.numpy as jnp
from jax.experimental import pallas as pl
from jax.experimental.pallas import tpu as pltpu  # noqa: F401

# ----------------------------- model config (small) -----------------------------
B = 2          # batch
S = 8          # sequence length
H = 32         # hidden size
NH = 4         # attention heads
HD = H // NH   # head dim
F = 64         # FFN intermediate size
LAYERS = 2     # encoder layers
VOCAB = 64
TYPE_VOCAB = 2
MAX_POS = 16
LN_EPS = 1e-12
BN_EPS = 1e-5
NEG_INF = -1e9


# ----------------------------- in-kernel helpers -----------------------------
def _layernorm(x, gamma, beta):
    # x: (R, H) f32, gamma/beta: (1, H)
    mean = jnp.mean(x, axis=-1, keepdims=True)
    var = jnp.mean((x - mean) ** 2, axis=-1, keepdims=True)
    return (x - mean) * jax.lax.rsqrt(var + LN_EPS) * gamma + beta


def _gelu_tanh(x):
    c = math.sqrt(2.0 / math.pi)
    return 0.5 * x * (1.0 + jnp.tanh(c * (x + 0.044715 * x * x * x)))


def _dense(v, w, b):
    return jnp.dot(v, w, preferred_element_type=jnp.float32) + b


# ----------------------------- fused forward kernel -----------------------------
def fused_forward_kernel(emb_ref, bias_ref,
                         embg_ref, embb_ref,
                         wq_ref, bq_ref, wk_ref, bk_ref, wv_ref, bv_ref,
                         wo_ref, bo_ref, ln1g_ref, ln1b_ref,
                         w1_ref, b1_ref, w2_ref, b2_ref, ln2g_ref, ln2b_ref,
                         hw_ref, hb_ref, bng_ref, bnb_ref,
                         o_ref):
    # --- embeddings LayerNorm on flattened (B*S, H) activations ---
    x = _layernorm(emb_ref[...].astype(jnp.float32), embg_ref[...], embb_ref[...])

    # Precomputed additive attention bias (B*S, B*S):
    # 0 for (same batch item, valid key), -1e9 otherwise (cross-batch or padding).
    bias = bias_ref[...]
    scale = 1.0 / math.sqrt(HD)

    # --- transformer encoder layers (static unroll, weights VMEM-resident) ---
    for l in range(LAYERS):
        q = _dense(x, wq_ref[l], bq_ref[l])                  # (B*S, H)
        k = _dense(x, wk_ref[l], bk_ref[l])
        v = _dense(x, wv_ref[l], bv_ref[l])

        head_outs = []
        for h in range(NH):
            sl = slice(h * HD, (h + 1) * HD)
            qh, kh, vh = q[:, sl], k[:, sl], v[:, sl]        # (B*S, HD)
            s = jax.lax.dot_general(
                qh, kh, (((1,), (1,)), ((), ())),
                preferred_element_type=jnp.float32)          # (B*S, B*S)
            s = s * scale + bias                             # batch-block + padding mask
            s = s - jnp.max(s, axis=-1, keepdims=True)
            e = jnp.exp(s)
            inv_denom = pl.reciprocal(jnp.sum(e, axis=-1, keepdims=True), approx=True)
            p = e * inv_denom                                # softmax rows
            head_outs.append(jnp.dot(p, vh, preferred_element_type=jnp.float32))
        ctx = jnp.concatenate(head_outs, axis=-1)            # (B*S, H)

        attn = _dense(ctx, wo_ref[l], bo_ref[l])
        h1 = _layernorm(x + attn, ln1g_ref[l], ln1b_ref[l])

        ffn = _dense(h1, w1_ref[l], b1_ref[l])               # (B*S, F)
        ffn = _gelu_tanh(ffn)
        ffn = _dense(ffn, w2_ref[l], b2_ref[l])              # (B*S, H)
        x = _layernorm(h1 + ffn, ln2g_ref[l], ln2b_ref[l])

    # --- head: Linear(H, 1) as a matmul ---
    logits = jnp.dot(x, hw_ref[...], preferred_element_type=jnp.float32) + hb_ref[...]  # (B*S, 1)

    # TODO(synk): Dropout(0.2) applied as identity (eval-mode); training-mode dropout
    # would use pltpu.prng_seed / pltpu.prng_random_bits.

    # BatchNorm1d over (B, S, 1): channels = S, normalize each position over the batch
    # (batch statistics; no running stats without a checkpoint), affine gamma/beta.
    rows = [logits[b * S:(b + 1) * S, :] for b in range(B)]  # B x (S, 1)
    mean = sum(rows) / float(B)                              # (S, 1)
    var = sum((r - mean) ** 2 for r in rows) / float(B)      # (S, 1)
    inv_std = jax.lax.rsqrt(var + BN_EPS)
    g = bng_ref[...]                                         # (S, 1)
    be = bnb_ref[...]                                        # (S, 1)
    for b in range(B):
        o_ref[b] = ((rows[b] - mean) * inv_std * g + be).astype(o_ref.dtype)


# ----------------------------- wrapper (single pallas_call) -----------------------------
def clrp_forward(params, input_ids, attention_mask, token_type_ids):
    # --- embeddings (gather = plain-JAX glue) ---
    emb = (jnp.take(params["word_emb"], input_ids, axis=0)
           + jnp.take(params["type_emb"], token_type_ids, axis=0)
           + params["pos_emb"][:S][None, :, :])              # (B, S, H)
    emb2d = emb.reshape(B * S, H).astype(jnp.float32)

    # --- block-diagonal additive attention bias over flattened rows ---
    batch_idx = jnp.arange(B * S, dtype=jnp.int32) // S
    same_batch = batch_idx[:, None] == batch_idx[None, :]
    key_valid = attention_mask.reshape(B * S) > 0
    attn_bias = jnp.where(same_batch & key_valid[None, :], 0.0, NEG_INF).astype(jnp.float32)

    args = (emb2d, attn_bias,
            params["emb_ln_g"], params["emb_ln_b"],
            params["wq"], params["bq"], params["wk"], params["bk"],
            params["wv"], params["bv"], params["wo"], params["bo"],
            params["ln1_g"], params["ln1_b"],
            params["w1"], params["b1"], params["w2"], params["b2"],
            params["ln2_g"], params["ln2_b"],
            params["head_w"], params["head_b"], params["bn_g"], params["bn_b"])

    # Single fused kernel: all inputs/outputs live whole in VMEM (no grid).
    logits = pl.pallas_call(
        fused_forward_kernel,
        out_shape=jax.ShapeDtypeStruct((B, S, 1), jnp.float32),
    )(*args)
    return logits                                            # (B, S, 1), matches PyTorch


# ----------------------------- parameter init (deterministic) -----------------------------
def init_params(key):
    keys = iter(jax.random.split(key, 64))

    def nrm(shape, scale=0.02):
        return (scale * jax.random.normal(next(keys), shape)).astype(jnp.float32)

    def ones(shape):
        return jnp.ones(shape, jnp.float32)

    def zeros(shape):
        return jnp.zeros(shape, jnp.float32)

    return {
        "word_emb": nrm((VOCAB, H)),
        "type_emb": nrm((TYPE_VOCAB, H)),
        "pos_emb": nrm((MAX_POS, H)),
        "emb_ln_g": ones((1, H)), "emb_ln_b": zeros((1, H)),
        # per-layer weights stacked along a leading layer axis (kept VMEM-resident)
        "wq": nrm((LAYERS, H, H)), "bq": zeros((LAYERS, 1, H)),
        "wk": nrm((LAYERS, H, H)), "bk": zeros((LAYERS, 1, H)),
        "wv": nrm((LAYERS, H, H)), "bv": zeros((LAYERS, 1, H)),
        "wo": nrm((LAYERS, H, H)), "bo": zeros((LAYERS, 1, H)),
        "ln1_g": ones((LAYERS, 1, H)), "ln1_b": zeros((LAYERS, 1, H)),
        "w1": nrm((LAYERS, H, F)), "b1": zeros((LAYERS, 1, F)),
        "w2": nrm((LAYERS, F, H)), "b2": zeros((LAYERS, 1, H)),
        "ln2_g": ones((LAYERS, 1, H)), "ln2_b": zeros((LAYERS, 1, H)),
        # head: Linear(H, 1) weight as a (H, 1) column, bias (1, 1)
        "head_w": nrm((H, 1)), "head_b": zeros((1, 1)),
        # BatchNorm1d affine params (num_features = S), stored as columns (S, 1)
        "bn_g": ones((S, 1)), "bn_b": zeros((S, 1)),
    }


# ----------------------------- main -----------------------------
if __name__ == "__main__":
    key = jax.random.PRNGKey(0)
    k_param, k_ids, k_type = jax.random.split(key, 3)

    params = init_params(k_param)

    input_ids = jax.random.randint(k_ids, (B, S), 0, VOCAB, dtype=jnp.int32)
    token_type_ids = jax.random.randint(k_type, (B, S), 0, TYPE_VOCAB, dtype=jnp.int32)
    # deterministic mask: last 2 tokens of batch item 1 are padding
    attention_mask = jnp.ones((B, S), jnp.int32).at[1, S - 2:].set(0)

    # TODO(synk): labels / loss_fn path not implemented (labels=None branch only).
    logits = clrp_forward(params, input_ids, attention_mask, token_type_ids)
    logits = jax.block_until_ready(logits)

    assert logits.shape == (B, S, 1), logits.shape
    assert bool(jnp.all(jnp.isfinite(logits)))
    print("KERNEL_OK")
</pallas_src>

<mosaic_0001>
module attributes {stable_mosaic.version = 11 : i64} {
  func.func @fused_forward_kernel(%arg0: memref<16x32xf32, #tpu.memory_space<vmem>>, %arg1: memref<16x16xf32, #tpu.memory_space<vmem>>, %arg2: memref<1x32xf32, #tpu.memory_space<vmem>>, %arg3: memref<1x32xf32, #tpu.memory_space<vmem>>, %arg4: memref<2x32x32xf32, #tpu.memory_space<vmem>>, %arg5: memref<2x1x32xf32, #tpu.memory_space<vmem>>, %arg6: memref<2x32x32xf32, #tpu.memory_space<vmem>>, %arg7: memref<2x1x32xf32, #tpu.memory_space<vmem>>, %arg8: memref<2x32x32xf32, #tpu.memory_space<vmem>>, %arg9: memref<2x1x32xf32, #tpu.memory_space<vmem>>, %arg10: memref<2x32x32xf32, #tpu.memory_space<vmem>>, %arg11: memref<2x1x32xf32, #tpu.memory_space<vmem>>, %arg12: memref<2x1x32xf32, #tpu.memory_space<vmem>>, %arg13: memref<2x1x32xf32, #tpu.memory_space<vmem>>, %arg14: memref<2x32x64xf32, #tpu.memory_space<vmem>>, %arg15: memref<2x1x64xf32, #tpu.memory_space<vmem>>, %arg16: memref<2x64x32xf32, #tpu.memory_space<vmem>>, %arg17: memref<2x1x32xf32, #tpu.memory_space<vmem>>, %arg18: memref<2x1x32xf32, #tpu.memory_space<vmem>>, %arg19: memref<2x1x32xf32, #tpu.memory_space<vmem>>, %arg20: memref<32x1xf32, #tpu.memory_space<vmem>>, %arg21: memref<1x1xf32, #tpu.memory_space<vmem>>, %arg22: memref<8x1xf32, #tpu.memory_space<vmem>>, %arg23: memref<8x1xf32, #tpu.memory_space<vmem>>, %arg24: memref<2x8x1xf32, #tpu.memory_space<vmem>>) attributes {dimension_semantics = [], scalar_prefetch = 0 : i64, scratch_operands = 0 : i64, tpu.core_type = #tpu.core_type<tc>} {
    %c0 = arith.constant 0 : index
    %c0_0 = arith.constant 0 : index
    %0 = vector.load %arg0[%c0, %c0_0] : memref<16x32xf32, #tpu.memory_space<vmem>>, vector<16x32xf32>
    %c0_1 = arith.constant 0 : index
    %c0_2 = arith.constant 0 : index
    %1 = vector.load %arg2[%c0_1, %c0_2] : memref<1x32xf32, #tpu.memory_space<vmem>>, vector<1x32xf32>
    %c0_3 = arith.constant 0 : index
    %c0_4 = arith.constant 0 : index
    %2 = vector.load %arg3[%c0_3, %c0_4] : memref<1x32xf32, #tpu.memory_space<vmem>>, vector<1x32xf32>
    %cst = arith.constant dense<0.000000e+00> : vector<16xf32>
    %3 = vector.multi_reduction <add>, %0, %cst [1] : vector<16x32xf32> to vector<16xf32>
    %4 = vector.shape_cast %3 : vector<16xf32> to vector<16x1xf32>
    %cst_5 = arith.constant 3.200000e+01 : f32
    %5 = vector.broadcast %cst_5 : f32 to vector<16x1xf32>
    %6 = arith.divf %4, %5 : vector<16x1xf32>
    %7 = vector.broadcast %6 : vector<16x1xf32> to vector<16x32xf32>
    %8 = arith.subf %0, %7 : vector<16x32xf32>
    %9 = arith.mulf %8, %8 : vector<16x32xf32>
    %cst_6 = arith.constant dense<0.000000e+00> : vector<16xf32>
    %10 = vector.multi_reduction <add>, %9, %cst_6 [1] : vector<16x32xf32> to vector<16xf32>
    %11 = vector.shape_cast %10 : vector<16xf32> to vector<16x1xf32>
    %cst_7 = arith.constant 3.200000e+01 : f32
    %12 = vector.broadcast %cst_7 : f32 to vector<16x1xf32>
    %13 = arith.divf %11, %12 : vector<16x1xf32>
    %14 = vector.broadcast %6 : vector<16x1xf32> to vector<16x32xf32>
    %15 = arith.subf %0, %14 : vector<16x32xf32>
    %cst_8 = arith.constant 9.99999996E-13 : f32
    %16 = vector.broadcast %cst_8 : f32 to vector<16x1xf32>
    %17 = arith.addf %13, %16 : vector<16x1xf32>
    %18 = math.rsqrt %17 : vector<16x1xf32>
    %19 = vector.broadcast %18 : vector<16x1xf32> to vector<16x32xf32>
    %20 = arith.mulf %15, %19 : vector<16x32xf32>
    %21 = vector.broadcast %1 : vector<1x32xf32> to vector<16x32xf32>
    %22 = arith.mulf %20, %21 : vector<16x32xf32>
    %23 = vector.broadcast %2 : vector<1x32xf32> to vector<16x32xf32>
    %24 = arith.addf %22, %23 : vector<16x32xf32>
    %c0_9 = arith.constant 0 : index
    %c0_10 = arith.constant 0 : index
    %25 = vector.load %arg1[%c0_9, %c0_10] : memref<16x16xf32, #tpu.memory_space<vmem>>, vector<16x16xf32>
    %c0_11 = arith.constant 0 : index
    %c0_12 = arith.constant 0 : index
    %c0_13 = arith.constant 0 : index
    %26 = vector.load %arg4[%c0_11, %c0_12, %c0_13] : memref<2x32x32xf32, #tpu.memory_space<vmem>>, vector<1x32x32xf32>
    %27 = vector.shape_cast %26 : vector<1x32x32xf32> to vector<32x32xf32>
    %c0_14 = arith.constant 0 : index
    %c0_15 = arith.constant 0 : index
    %c0_16 = arith.constant 0 : index
    %28 = vector.load %arg5[%c0_14, %c0_15, %c0_16] : memref<2x1x32xf32, #tpu.memory_space<vmem>>, vector<1x1x32xf32>
    %29 = vector.shape_cast %28 : vector<1x1x32xf32> to vector<1x32xf32>
    %cst_17 = arith.constant dense<0.000000e+00> : vector<16x32xf32>
    %30 = tpu.matmul %24, %27, %cst_17 {dimension_numbers = #tpu.dot_dimension_numbers<[1], [0], [0], [1], [0, 0, 1, 1], [], []>} : vector<16x32xf32>, vector<32x32xf32>, vector<16x32xf32> -> vector<16x32xf32>
    %31 = vector.broadcast %29 : vector<1x32xf32> to vector<16x32xf32>
    %32 = arith.addf %30, %31 : vector<16x32xf32>
    %c0_18 = arith.constant 0 : index
    %c0_19 = arith.constant 0 : index
    %c0_20 = arith.constant 0 : index
    %33 = vector.load %arg6[%c0_18, %c0_19, %c0_20] : memref<2x32x32xf32, #tpu.memory_space<vmem>>, vector<1x32x32xf32>
    %34 = vector.shape_cast %33 : vector<1x32x32xf32> to vector<32x32xf32>
    %c0_21 = arith.constant 0 : index
    %c0_22 = arith.constant 0 : index
    %c0_23 = arith.constant 0 : index
    %35 = vector.load %arg7[%c0_21, %c0_22, %c0_23] : memref<2x1x32xf32, #tpu.memory_space<vmem>>, vector<1x1x32xf32>
    %36 = vector.shape_cast %35 : vector<1x1x32xf32> to vector<1x32xf32>
    %cst_24 = arith.constant dense<0.000000e+00> : vector<16x32xf32>
    %37 = tpu.matmul %24, %34, %cst_24 {dimension_numbers = #tpu.dot_dimension_numbers<[1], [0], [0], [1], [0, 0, 1, 1], [], []>} : vector<16x32xf32>, vector<32x32xf32>, vector<16x32xf32> -> vector<16x32xf32>
    %38 = vector.broadcast %36 : vector<1x32xf32> to vector<16x32xf32>
    %39 = arith.addf %37, %38 : vector<16x32xf32>
    %c0_25 = arith.constant 0 : index
    %c0_26 = arith.constant 0 : index
    %c0_27 = arith.constant 0 : index
    %40 = vector.load %arg8[%c0_25, %c0_26, %c0_27] : memref<2x32x32xf32, #tpu.memory_space<vmem>>, vector<1x32x32xf32>
    %41 = vector.shape_cast %40 : vector<1x32x32xf32> to vector<32x32xf32>
    %c0_28 = arith.constant 0 : index
    %c0_29 = arith.constant 0 : index
    %c0_30 = arith.constant 0 : index
    %42 = vector.load %arg9[%c0_28, %c0_29, %c0_30] : memref<2x1x32xf32, #tpu.memory_space<vmem>>, vector<1x1x32xf32>
    %43 = vector.shape_cast %42 : vector<1x1x32xf32> to vector<1x32xf32>
    %cst_31 = arith.constant dense<0.000000e+00> : vector<16x32xf32>
    %44 = tpu.matmul %24, %41, %cst_31 {dimension_numbers = #tpu.dot_dimension_numbers<[1], [0], [0], [1], [0, 0, 1, 1], [], []>} : vector<16x32xf32>, vector<32x32xf32>, vector<16x32xf32> -> vector<16x32xf32>
    %45 = vector.broadcast %43 : vector<1x32xf32> to vector<16x32xf32>
    %46 = arith.addf %44, %45 : vector<16x32xf32>
    %47 = vector.extract_strided_slice %32 {offsets = [0, 0], sizes = [16, 8], strides = [1, 1]} : vector<16x32xf32> to vector<16x8xf32>
    %48 = vector.extract_strided_slice %39 {offsets = [0, 0], sizes = [16, 8], strides = [1, 1]} : vector<16x32xf32> to vector<16x8xf32>
    %49 = vector.extract_strided_slice %46 {offsets = [0, 0], sizes = [16, 8], strides = [1, 1]} : vector<16x32xf32> to vector<16x8xf32>
    %cst_32 = arith.constant dense<0.000000e+00> : vector<16x16xf32>
    %50 = tpu.matmul %47, %48, %cst_32 {dimension_numbers = #tpu.dot_dimension_numbers<[1], [1], [0], [0], [0, 0, 1, 0], [], []>} : vector<16x8xf32>, vector<16x8xf32>, vector<16x16xf32> -> vector<16x16xf32>
    %cst_33 = arith.constant 0.353553385 : f32
    %51 = vector.broadcast %cst_33 : f32 to vector<16x16xf32>
    %52 = arith.mulf %50, %51 : vector<16x16xf32>
    %53 = arith.addf %52, %25 : vector<16x16xf32>
    %cst_34 = arith.constant dense<0xFF800000> : vector<16xf32>
    %54 = vector.multi_reduction <maximumf>, %53, %cst_34 [1] : vector<16x16xf32> to vector<16xf32>
    %55 = vector.shape_cast %54 : vector<16xf32> to vector<16x1xf32>
    %56 = vector.broadcast %55 : vector<16x1xf32> to vector<16x16xf32>
    %57 = arith.subf %53, %56 : vector<16x16xf32>
    %58 = math.exp %57 : vector<16x16xf32>
    %cst_35 = arith.constant dense<0.000000e+00> : vector<16xf32>
    %59 = vector.multi_reduction <add>, %58, %cst_35 [1] : vector<16x16xf32> to vector<16xf32>
    %60 = vector.shape_cast %59 : vector<16xf32> to vector<16x1xf32>
    %61 = tpu.reciprocal %60 {approx = true} : vector<16x1xf32> -> vector<16x1xf32>
    %62 = vector.broadcast %61 : vector<16x1xf32> to vector<16x16xf32>
    %63 = arith.mulf %58, %62 : vector<16x16xf32>
    %cst_36 = arith.constant dense<0.000000e+00> : vector<16x8xf32>
    %64 = tpu.matmul %63, %49, %cst_36 {dimension_numbers = #tpu.dot_dimension_numbers<[1], [0], [0], [1], [0, 0, 1, 1], [], []>} : vector<16x16xf32>, vector<16x8xf32>, vector<16x8xf32> -> vector<16x8xf32>
    %65 = vector.extract_strided_slice %32 {offsets = [0, 8], sizes = [16, 8], strides = [1, 1]} : vector<16x32xf32> to vector<16x8xf32>
    %66 = vector.extract_strided_slice %39 {offsets = [0, 8], sizes = [16, 8], strides = [1, 1]} : vector<16x32xf32> to vector<16x8xf32>
    %67 = vector.extract_strided_slice %46 {offsets = [0, 8], sizes = [16, 8], strides = [1, 1]} : vector<16x32xf32> to vector<16x8xf32>
    %cst_37 = arith.constant dense<0.000000e+00> : vector<16x16xf32>
    %68 = tpu.matmul %65, %66, %cst_37 {dimension_numbers = #tpu.dot_dimension_numbers<[1], [1], [0], [0], [0, 0, 1, 0], [], []>} : vector<16x8xf32>, vector<16x8xf32>, vector<16x16xf32> -> vector<16x16xf32>
    %cst_38 = arith.constant 0.353553385 : f32
    %69 = vector.broadcast %cst_38 : f32 to vector<16x16xf32>
    %70 = arith.mulf %68, %69 : vector<16x16xf32>
    %71 = arith.addf %70, %25 : vector<16x16xf32>
    %cst_39 = arith.constant dense<0xFF800000> : vector<16xf32>
    %72 = vector.multi_reduction <maximumf>, %71, %cst_39 [1] : vector<16x16xf32> to vector<16xf32>
    %73 = vector.shape_cast %72 : vector<16xf32> to vector<16x1xf32>
    %74 = vector.broadcast %73 : vector<16x1xf32> to vector<16x16xf32>
    %75 = arith.subf %71, %74 : vector<16x16xf32>
    %76 = math.exp %75 : vector<16x16xf32>
    %cst_40 = arith.constant dense<0.000000e+00> : vector<16xf32>
    %77 = vector.multi_reduction <add>, %76, %cst_40 [1] : vector<16x16xf32> to vector<16xf32>
    %78 = vector.shape_cast %77 : vector<16xf32> to vector<16x1xf32>
    %79 = tpu.reciprocal %78 {approx = true} : vector<16x1xf32> -> vector<16x1xf32>
    %80 = vector.broadcast %79 : vector<16x1xf32> to vector<16x16xf32>
    %81 = arith.mulf %76, %80 : vector<16x16xf32>
    %cst_41 = arith.constant dense<0.000000e+00> : vector<16x8xf32>
    %82 = tpu.matmul %81, %67, %cst_41 {dimension_numbers = #tpu.dot_dimension_numbers<[1], [0], [0], [1], [0, 0, 1, 1], [], []>} : vector<16x16xf32>, vector<16x8xf32>, vector<16x8xf32> -> vector<16x8xf32>
    %83 = vector.extract_strided_slice %32 {offsets = [0, 16], sizes = [16, 8], strides = [1, 1]} : vector<16x32xf32> to vector<16x8xf32>
    %84 = vector.extract_strided_slice %39 {offsets = [0, 16], sizes = [16, 8], strides = [1, 1]} : vector<16x32xf32> to vector<16x8xf32>
    %85 = vector.extract_strided_slice %46 {offsets = [0, 16], sizes = [16, 8], strides = [1, 1]} : vector<16x32xf32> to vector<16x8xf32>
    %cst_42 = arith.constant dense<0.000000e+00> : vector<16x16xf32>
    %86 = tpu.matmul %83, %84, %cst_42 {dimension_numbers = #tpu.dot_dimension_numbers<[1], [1], [0], [0], [0, 0, 1, 0], [], []>} : vector<16x8xf32>, vector<16x8xf32>, vector<16x16xf32> -> vector<16x16xf32>
    %cst_43 = arith.constant 0.353553385 : f32
    %87 = vector.broadcast %cst_43 : f32 to vector<16x16xf32>
    %88 = arith.mulf %86, %87 : vector<16x16xf32>
    %89 = arith.addf %88, %25 : vector<16x16xf32>
    %cst_44 = arith.constant dense<0xFF800000> : vector<16xf32>
    %90 = vector.multi_reduction <maximumf>, %89, %cst_44 [1] : vector<16x16xf32> to vector<16xf32>
    %91 = vector.shape_cast %90 : vector<16xf32> to vector<16x1xf32>
    %92 = vector.broadcast %91 : vector<16x1xf32> to vector<16x16xf32>
    %93 = arith.subf %89, %92 : vector<16x16xf32>
    %94 = math.exp %93 : vector<16x16xf32>
    %cst_45 = arith.constant dense<0.000000e+00> : vector<16xf32>
    %95 = vector.multi_reduction <add>, %94, %cst_45 [1] : vector<16x16xf32> to vector<16xf32>
    %96 = vector.shape_cast %95 : vector<16xf32> to vector<16x1xf32>
    %97 = tpu.reciprocal %96 {approx = true} : vector<16x1xf32> -> vector<16x1xf32>
    %98 = vector.broadcast %97 : vector<16x1xf32> to vector<16x16xf32>
    %99 = arith.mulf %94, %98 : vector<16x16xf32>
    %cst_46 = arith.constant dense<0.000000e+00> : vector<16x8xf32>
    %100 = tpu.matmul %99, %85, %cst_46 {dimension_numbers = #tpu.dot_dimension_numbers<[1], [0], [0], [1], [0, 0, 1, 1], [], []>} : vector<16x16xf32>, vector<16x8xf32>, vector<16x8xf32> -> vector<16x8xf32>
    %101 = vector.extract_strided_slice %32 {offsets = [0, 24], sizes = [16, 8], strides = [1, 1]} : vector<16x32xf32> to vector<16x8xf32>
    %102 = vector.extract_strided_slice %39 {offsets = [0, 24], sizes = [16, 8], strides = [1, 1]} : vector<16x32xf32> to vector<16x8xf32>
    %103 = vector.extract_strided_slice %46 {offsets = [0, 24], sizes = [16, 8], strides = [1, 1]} : vector<16x32xf32> to vector<16x8xf32>
    %cst_47 = arith.constant dense<0.000000e+00> : vector<16x16xf32>
    %104 = tpu.matmul %101, %102, %cst_47 {dimension_numbers = #tpu.dot_dimension_numbers<[1], [1], [0], [0], [0, 0, 1, 0], [], []>} : vector<16x8xf32>, vector<16x8xf32>, vector<16x16xf32> -> vector<16x16xf32>
    %cst_48 = arith.constant 0.353553385 : f32
    %105 = vector.broadcast %cst_48 : f32 to vector<16x16xf32>
    %106 = arith.mulf %104, %105 : vector<16x16xf32>
    %107 = arith.addf %106, %25 : vector<16x16xf32>
    %cst_49 = arith.constant dense<0xFF800000> : vector<16xf32>
    %108 = vector.multi_reduction <maximumf>, %107, %cst_49 [1] : vector<16x16xf32> to vector<16xf32>
    %109 = vector.shape_cast %108 : vector<16xf32> to vector<16x1xf32>
    %110 = vector.broadcast %109 : vector<16x1xf32> to vector<16x16xf32>
    %111 = arith.subf %107, %110 : vector<16x16xf32>
    %112 = math.exp %111 : vector<16x16xf32>
    %cst_50 = arith.constant dense<0.000000e+00> : vector<16xf32>
    %113 = vector.multi_reduction <add>, %112, %cst_50 [1] : vector<16x16xf32> to vector<16xf32>
    %114 = vector.shape_cast %113 : vector<16xf32> to vector<16x1xf32>
    %115 = tpu.reciprocal %114 {approx = true} : vector<16x1xf32> -> vector<16x1xf32>
    %116 = vector.broadcast %115 : vector<16x1xf32> to vector<16x16xf32>
    %117 = arith.mulf %112, %116 : vector<16x16xf32>
    %cst_51 = arith.constant dense<0.000000e+00> : vector<16x8xf32>
    %118 = tpu.matmul %117, %103, %cst_51 {dimension_numbers = #tpu.dot_dimension_numbers<[1], [0], [0], [1], [0, 0, 1, 1], [], []>} : vector<16x16xf32>, vector<16x8xf32>, vector<16x8xf32> -> vector<16x8xf32>
    %119 = tpu.concatenate %64, %82, %100, %118 in 1 : vector<16x8xf32>, vector<16x8xf32>, vector<16x8xf32>, vector<16x8xf32> -> vector<16x32xf32>
    %c0_52 = arith.constant 0 : index
    %c0_53 = arith.constant 0 : index
    %c0_54 = arith.constant 0 : index
    %120 = vector.load %arg10[%c0_52, %c0_53, %c0_54] : memref<2x32x32xf32, #tpu.memory_space<vmem>>, vector<1x32x32xf32>
    %121 = vector.shape_cast %120 : vector<1x32x32xf32> to vector<32x32xf32>
    %c0_55 = arith.constant 0 : index
    %c0_56 = arith.constant 0 : index
    %c0_57 = arith.constant 0 : index
    %122 = vector.load %arg11[%c0_55, %c0_56, %c0_57] : memref<2x1x32xf32, #tpu.memory_space<vmem>>, vector<1x1x32xf32>
    %123 = vector.shape_cast %122 : vector<1x1x32xf32> to vector<1x32xf32>
    %cst_58 = arith.constant dense<0.000000e+00> : vector<16x32xf32>
    %124 = tpu.matmul %119, %121, %cst_58 {dimension_numbers = #tpu.dot_dimension_numbers<[1], [0], [0], [1], [0, 0, 1, 1], [], []>} : vector<16x32xf32>, vector<32x32xf32>, vector<16x32xf32> -> vector<16x32xf32>
    %125 = vector.broadcast %123 : vector<1x32xf32> to vector<16x32xf32>
    %126 = arith.addf %124, %125 : vector<16x32xf32>
    %127 = arith.addf %24, %126 : vector<16x32xf32>
    %c0_59 = arith.constant 0 : index
    %c0_60 = arith.constant 0 : index
    %c0_61 = arith.constant 0 : index
    %128 = vector.load %arg12[%c0_59, %c0_60, %c0_61] : memref<2x1x32xf32, #tpu.memory_space<vmem>>, vector<1x1x32xf32>
    %129 = vector.shape_cast %128 : vector<1x1x32xf32> to vector<1x32xf32>
    %c0_62 = arith.constant 0 : index
    %c0_63 = arith.constant 0 : index
    %c0_64 = arith.constant 0 : index
    %130 = vector.load %arg13[%c0_62, %c0_63, %c0_64] : memref<2x1x32xf32, #tpu.memory_space<vmem>>, vector<1x1x32xf32>
    %131 = vector.shape_cast %130 : vector<1x1x32xf32> to vector<1x32xf32>
    %cst_65 = arith.constant dense<0.000000e+00> : vector<16xf32>
    %132 = vector.multi_reduction <add>, %127, %cst_65 [1] : vector<16x32xf32> to vector<16xf32>
    %133 = vector.shape_cast %132 : vector<16xf32> to vector<16x1xf32>
    %cst_66 = arith.constant 3.200000e+01 : f32
    %134 = vector.broadcast %cst_66 : f32 to vector<16x1xf32>
    %135 = arith.divf %133, %134 : vector<16x1xf32>
    %136 = vector.broadcast %135 : vector<16x1xf32> to vector<16x32xf32>
    %137 = arith.subf %127, %136 : vector<16x32xf32>
    %138 = arith.mulf %137, %137 : vector<16x32xf32>
    %cst_67 = arith.constant dense<0.000000e+00> : vector<16xf32>
    %139 = vector.multi_reduction <add>, %138, %cst_67 [1] : vector<16x32xf32> to vector<16xf32>
    %140 = vector.shape_cast %139 : vector<16xf32> to vector<16x1xf32>
    %cst_68 = arith.constant 3.200000e+01 : f32
    %141 = vector.broadcast %cst_68 : f32 to vector<16x1xf32>
    %142 = arith.divf %140, %141 : vector<16x1xf32>
    %143 = vector.broadcast %135 : vector<16x1xf32> to vector<16x32xf32>
    %144 = arith.subf %127, %143 : vector<16x32xf32>
    %cst_69 = arith.constant 9.99999996E-13 : f32
    %145 = vector.broadcast %cst_69 : f32 to vector<16x1xf32>
    %146 = arith.addf %142, %145 : vector<16x1xf32>
    %147 = math.rsqrt %146 : vector<16x1xf32>
    %148 = vector.broadcast %147 : vector<16x1xf32> to vector<16x32xf32>
    %149 = arith.mulf %144, %148 : vector<16x32xf32>
    %150 = vector.broadcast %129 : vector<1x32xf32> to vector<16x32xf32>
    %151 = arith.mulf %149, %150 : vector<16x32xf32>
    %152 = vector.broadcast %131 : vector<1x32xf32> to vector<16x32xf32>
    %153 = arith.addf %151, %152 : vector<16x32xf32>
    %c0_70 = arith.constant 0 : index
    %c0_71 = arith.constant 0 : index
    %c0_72 = arith.constant 0 : index
    %154 = vector.load %arg14[%c0_70, %c0_71, %c0_72] : memref<2x32x64xf32, #tpu.memory_space<vmem>>, vector<1x32x64xf32>
    %155 = vector.shape_cast %154 : vector<1x32x64xf32> to vector<32x64xf32>
    %c0_73 = arith.constant 0 : index
    %c0_74 = arith.constant 0 : index
    %c0_75 = arith.constant 0 : index
    %156 = vector.load %arg15[%c0_73, %c0_74, %c0_75] : memref<2x1x64xf32, #tpu.memory_space<vmem>>, vector<1x1x64xf32>
    %157 = vector.shape_cast %156 : vector<1x1x64xf32> to vector<1x64xf32>
    %cst_76 = arith.constant dense<0.000000e+00> : vector<16x64xf32>
    %158 = tpu.matmul %153, %155, %cst_76 {dimension_numbers = #tpu.dot_dimension_numbers<[1], [0], [0], [1], [0, 0, 1, 1], [], []>} : vector<16x32xf32>, vector<32x64xf32>, vector<16x64xf32> -> vector<16x64xf32>
    %159 = vector.broadcast %157 : vector<1x64xf32> to vector<16x64xf32>
    %160 = arith.addf %158, %159 : vector<16x64xf32>
    %cst_77 = arith.constant 5.000000e-01 : f32
    %161 = vector.broadcast %cst_77 : f32 to vector<16x64xf32>
    %162 = arith.mulf %161, %160 : vector<16x64xf32>
    %cst_78 = arith.constant 4.471500e-02 : f32
    %163 = vector.broadcast %cst_78 : f32 to vector<16x64xf32>
    %164 = arith.mulf %163, %160 : vector<16x64xf32>
    %165 = arith.mulf %164, %160 : vector<16x64xf32>
    %166 = arith.mulf %165, %160 : vector<16x64xf32>
    %167 = arith.addf %160, %166 : vector<16x64xf32>
    %cst_79 = arith.constant 0.797884583 : f32
    %168 = vector.broadcast %cst_79 : f32 to vector<16x64xf32>
    %169 = arith.mulf %168, %167 : vector<16x64xf32>
    %170 = math.tanh %169 : vector<16x64xf32>
    %cst_80 = arith.constant 1.000000e+00 : f32
    %171 = vector.broadcast %cst_80 : f32 to vector<16x64xf32>
    %172 = arith.addf %171, %170 : vector<16x64xf32>
    %173 = arith.mulf %162, %172 : vector<16x64xf32>
    %c0_81 = arith.constant 0 : index
    %c0_82 = arith.constant 0 : index
    %c0_83 = arith.constant 0 : index
    %174 = vector.load %arg16[%c0_81, %c0_82, %c0_83] : memref<2x64x32xf32, #tpu.memory_space<vmem>>, vector<1x64x32xf32>
    %175 = vector.shape_cast %174 : vector<1x64x32xf32> to vector<64x32xf32>
    %c0_84 = arith.constant 0 : index
    %c0_85 = arith.constant 0 : index
    %c0_86 = arith.constant 0 : index
    %176 = vector.load %arg17[%c0_84, %c0_85, %c0_86] : memref<2x1x32xf32, #tpu.memory_space<vmem>>, vector<1x1x32xf32>
    %177 = vector.shape_cast %176 : vector<1x1x32xf32> to vector<1x32xf32>
    %cst_87 = arith.constant dense<0.000000e+00> : vector<16x32xf32>
    %178 = tpu.matmul %173, %175, %cst_87 {dimension_numbers = #tpu.dot_dimension_numbers<[1], [0], [0], [1], [0, 0, 1, 1], [], []>} : vector<16x64xf32>, vector<64x32xf32>, vector<16x32xf32> -> vector<16x32xf32>
    %179 = vector.broadcast %177 : vector<1x32xf32> to vector<16x32xf32>
    %180 = arith.addf %178, %179 : vector<16x32xf32>
    %181 = arith.addf %153, %180 : vector<16x32xf32>
    %c0_88 = arith.constant 0 : index
    %c0_89 = arith.constant 0 : index
    %c0_90 = arith.constant 0 : index
    %182 = vector.load %arg18[%c0_88, %c0_89, %c0_90] : memref<2x1x32xf32, #tpu.memory_space<vmem>>, vector<1x1x32xf32>
    %183 = vector.shape_cast %182 : vector<1x1x32xf32> to vector<1x32xf32>
    %c0_91 = arith.constant 0 : index
    %c0_92 = arith.constant 0 : index
    %c0_93 = arith.constant 0 : index
    %184 = vector.load %arg19[%c0_91, %c0_92, %c0_93] : memref<2x1x32xf32, #tpu.memory_space<vmem>>, vector<1x1x32xf32>
    %185 = vector.shape_cast %184 : vector<1x1x32xf32> to vector<1x32xf32>
    %cst_94 = arith.constant dense<0.000000e+00> : vector<16xf32>
    %186 = vector.multi_reduction <add>, %181, %cst_94 [1] : vector<16x32xf32> to vector<16xf32>
    %187 = vector.shape_cast %186 : vector<16xf32> to vector<16x1xf32>
    %cst_95 = arith.constant 3.200000e+01 : f32
    %188 = vector.broadcast %cst_95 : f32 to vector<16x1xf32>
    %189 = arith.divf %187, %188 : vector<16x1xf32>
    %190 = vector.broadcast %189 : vector<16x1xf32> to vector<16x32xf32>
    %191 = arith.subf %181, %190 : vector<16x32xf32>
    %192 = arith.mulf %191, %191 : vector<16x32xf32>
    %cst_96 = arith.constant dense<0.000000e+00> : vector<16xf32>
    %193 = vector.multi_reduction <add>, %192, %cst_96 [1] : vector<16x32xf32> to vector<16xf32>
    %194 = vector.shape_cast %193 : vector<16xf32> to vector<16x1xf32>
    %cst_97 = arith.constant 3.200000e+01 : f32
    %195 = vector.broadcast %cst_97 : f32 to vector<16x1xf32>
    %196 = arith.divf %194, %195 : vector<16x1xf32>
    %197 = vector.broadcast %189 : vector<16x1xf32> to vector<16x32xf32>
    %198 = arith.subf %181, %197 : vector<16x32xf32>
    %cst_98 = arith.constant 9.99999996E-13 : f32
    %199 = vector.broadcast %cst_98 : f32 to vector<16x1xf32>
    %200 = arith.addf %196, %199 : vector<16x1xf32>
    %201 = math.rsqrt %200 : vector<16x1xf32>
    %202 = vector.broadcast %201 : vector<16x1xf32> to vector<16x32xf32>
    %203 = arith.mulf %198, %202 : vector<16x32xf32>
    %204 = vector.broadcast %183 : vector<1x32xf32> to vector<16x32xf32>
    %205 = arith.mulf %203, %204 : vector<16x32xf32>
    %206 = vector.broadcast %185 : vector<1x32xf32> to vector<16x32xf32>
    %207 = arith.addf %205, %206 : vector<16x32xf32>
    %c1 = arith.constant 1 : index
    %c0_99 = arith.constant 0 : index
    %c0_100 = arith.constant 0 : index
    %208 = vector.load %arg4[%c1, %c0_99, %c0_100] : memref<2x32x32xf32, #tpu.memory_space<vmem>>, vector<1x32x32xf32>
    %209 = vector.shape_cast %208 : vector<1x32x32xf32> to vector<32x32xf32>
    %c1_101 = arith.constant 1 : index
    %c0_102 = arith.constant 0 : index
    %c0_103 = arith.constant 0 : index
    %210 = vector.load %arg5[%c1_101, %c0_102, %c0_103] : memref<2x1x32xf32, #tpu.memory_space<vmem>>, vector<1x1x32xf32>
    %211 = vector.shape_cast %210 : vector<1x1x32xf32> to vector<1x32xf32>
    %cst_104 = arith.constant dense<0.000000e+00> : vector<16x32xf32>
    %212 = tpu.matmul %207, %209, %cst_104 {dimension_numbers = #tpu.dot_dimension_numbers<[1], [0], [0], [1], [0, 0, 1, 1], [], []>} : vector<16x32xf32>, vector<32x32xf32>, vector<16x32xf32> -> vector<16x32xf32>
    %213 = vector.broadcast %211 : vector<1x32xf32> to vector<16x32xf32>
    %214 = arith.addf %212, %213 : vector<16x32xf32>
    %c1_105 = arith.constant 1 : index
    %c0_106 = arith.constant 0 : index
    %c0_107 = arith.constant 0 : index
    %215 = vector.load %arg6[%c1_105, %c0_106, %c0_107] : memref<2x32x32xf32, #tpu.memory_space<vmem>>, vector<1x32x32xf32>
    %216 = vector.shape_cast %215 : vector<1x32x32xf32> to vector<32x32xf32>
    %c1_108 = arith.constant 1 : index
    %c0_109 = arith.constant 0 : index
    %c0_110 = arith.constant 0 : index
    %217 = vector.load %arg7[%c1_108, %c0_109, %c0_110] : memref<2x1x32xf32, #tpu.memory_space<vmem>>, vector<1x1x32xf32>
    %218 = vector.shape_cast %217 : vector<1x1x32xf32> to vector<1x32xf32>
    %cst_111 = arith.constant dense<0.000000e+00> : vector<16x32xf32>
    %219 = tpu.matmul %207, %216, %cst_111 {dimension_numbers = #tpu.dot_dimension_numbers<[1], [0], [0], [1], [0, 0, 1, 1], [], []>} : vector<16x32xf32>, vector<32x32xf32>, vector<16x32xf32> -> vector<16x32xf32>
    %220 = vector.broadcast %218 : vector<1x32xf32> to vector<16x32xf32>
    %221 = arith.addf %219, %220 : vector<16x32xf32>
    %c1_112 = arith.constant 1 : index
    %c0_113 = arith.constant 0 : index
    %c0_114 = arith.constant 0 : index
    %222 = vector.load %arg8[%c1_112, %c0_113, %c0_114] : memref<2x32x32xf32, #tpu.memory_space<vmem>>, vector<1x32x32xf32>
    %223 = vector.shape_cast %222 : vector<1x32x32xf32> to vector<32x32xf32>
    %c1_115 = arith.constant 1 : index
    %c0_116 = arith.constant 0 : index
    %c0_117 = arith.constant 0 : index
    %224 = vector.load %arg9[%c1_115, %c0_116, %c0_117] : memref<2x1x32xf32, #tpu.memory_space<vmem>>, vector<1x1x32xf32>
    %225 = vector.shape_cast %224 : vector<1x1x32xf32> to vector<1x32xf32>
    %cst_118 = arith.constant dense<0.000000e+00> : vector<16x32xf32>
    %226 = tpu.matmul %207, %223, %cst_118 {dimension_numbers = #tpu.dot_dimension_numbers<[1], [0], [0], [1], [0, 0, 1, 1], [], []>} : vector<16x32xf32>, vector<32x32xf32>, vector<16x32xf32> -> vector<16x32xf32>
    %227 = vector.broadcast %225 : vector<1x32xf32> to vector<16x32xf32>
    %228 = arith.addf %226, %227 : vector<16x32xf32>
    %229 = vector.extract_strided_slice %214 {offsets = [0, 0], sizes = [16, 8], strides = [1, 1]} : vector<16x32xf32> to vector<16x8xf32>
    %230 = vector.extract_strided_slice %221 {offsets = [0, 0], sizes = [16, 8], strides = [1, 1]} : vector<16x32xf32> to vector<16x8xf32>
    %231 = vector.extract_strided_slice %228 {offsets = [0, 0], sizes = [16, 8], strides = [1, 1]} : vector<16x32xf32> to vector<16x8xf32>
    %cst_119 = arith.constant dense<0.000000e+00> : vector<16x16xf32>
    %232 = tpu.matmul %229, %230, %cst_119 {dimension_numbers = #tpu.dot_dimension_numbers<[1], [1], [0], [0], [0, 0, 1, 0], [], []>} : vector<16x8xf32>, vector<16x8xf32>, vector<16x16xf32> -> vector<16x16xf32>
    %cst_120 = arith.constant 0.353553385 : f32
    %233 = vector.broadcast %cst_120 : f32 to vector<16x16xf32>
    %234 = arith.mulf %232, %233 : vector<16x16xf32>
    %235 = arith.addf %234, %25 : vector<16x16xf32>
    %cst_121 = arith.constant dense<0xFF800000> : vector<16xf32>
    %236 = vector.multi_reduction <maximumf>, %235, %cst_121 [1] : vector<16x16xf32> to vector<16xf32>
    %237 = vector.shape_cast %236 : vector<16xf32> to vector<16x1xf32>
    %238 = vector.broadcast %237 : vector<16x1xf32> to vector<16x16xf32>
    %239 = arith.subf %235, %238 : vector<16x16xf32>
    %240 = math.exp %239 : vector<16x16xf32>
    %cst_122 = arith.constant dense<0.000000e+00> : vector<16xf32>
    %241 = vector.multi_reduction <add>, %240, %cst_122 [1] : vector<16x16xf32> to vector<16xf32>
    %242 = vector.shape_cast %241 : vector<16xf32> to vector<16x1xf32>
    %243 = tpu.reciprocal %242 {approx = true} : vector<16x1xf32> -> vector<16x1xf32>
    %244 = vector.broadcast %243 : vector<16x1xf32> to vector<16x16xf32>
    %245 = arith.mulf %240, %244 : vector<16x16xf32>
    %cst_123 = arith.constant dense<0.000000e+00> : vector<16x8xf32>
    %246 = tpu.matmul %245, %231, %cst_123 {dimension_numbers = #tpu.dot_dimension_numbers<[1], [0], [0], [1], [0, 0, 1, 1], [], []>} : vector<16x16xf32>, vector<16x8xf32>, vector<16x8xf32> -> vector<16x8xf32>
    %247 = vector.extract_strided_slice %214 {offsets = [0, 8], sizes = [16, 8], strides = [1, 1]} : vector<16x32xf32> to vector<16x8xf32>
    %248 = vector.extract_strided_slice %221 {offsets = [0, 8], sizes = [16, 8], strides = [1, 1]} : vector<16x32xf32> to vector<16x8xf32>
    %249 = vector.extract_strided_slice %228 {offsets = [0, 8], sizes = [16, 8], strides = [1, 1]} : vector<16x32xf32> to vector<16x8xf32>
    %cst_124 = arith.constant dense<0.000000e+00> : vector<16x16xf32>
    %250 = tpu.matmul %247, %248, %cst_124 {dimension_numbers = #tpu.dot_dimension_numbers<[1], [1], [0], [0], [0, 0, 1, 0], [], []>} : vector<16x8xf32>, vector<16x8xf32>, vector<16x16xf32> -> vector<16x16xf32>
    %cst_125 = arith.constant 0.353553385 : f32
    %251 = vector.broadcast %cst_125 : f32 to vector<16x16xf32>
    %252 = arith.mulf %250, %251 : vector<16x16xf32>
    %253 = arith.addf %252, %25 : vector<16x16xf32>
    %cst_126 = arith.constant dense<0xFF800000> : vector<16xf32>
    %254 = vector.multi_reduction <maximumf>, %253, %cst_126 [1] : vector<16x16xf32> to vector<16xf32>
    %255 = vector.shape_cast %254 : vector<16xf32> to vector<16x1xf32>
    %256 = vector.broadcast %255 : vector<16x1xf32> to vector<16x16xf32>
    %257 = arith.subf %253, %256 : vector<16x16xf32>
    %258 = math.exp %257 : vector<16x16xf32>
    %cst_127 = arith.constant dense<0.000000e+00> : vector<16xf32>
    %259 = vector.multi_reduction <add>, %258, %cst_127 [1] : vector<16x16xf32> to vector<16xf32>
    %260 = vector.shape_cast %259 : vector<16xf32> to vector<16x1xf32>
    %261 = tpu.reciprocal %260 {approx = true} : vector<16x1xf32> -> vector<16x1xf32>
    %262 = vector.broadcast %261 : vector<16x1xf32> to vector<16x16xf32>
    %263 = arith.mulf %258, %262 : vector<16x16xf32>
    %cst_128 = arith.constant dense<0.000000e+00> : vector<16x8xf32>
    %264 = tpu.matmul %263, %249, %cst_128 {dimension_numbers = #tpu.dot_dimension_numbers<[1], [0], [0], [1], [0, 0, 1, 1], [], []>} : vector<16x16xf32>, vector<16x8xf32>, vector<16x8xf32> -> vector<16x8xf32>
    %265 = vector.extract_strided_slice %214 {offsets = [0, 16], sizes = [16, 8], strides = [1, 1]} : vector<16x32xf32> to vector<16x8xf32>
    %266 = vector.extract_strided_slice %221 {offsets = [0, 16], sizes = [16, 8], strides = [1, 1]} : vector<16x32xf32> to vector<16x8xf32>
    %267 = vector.extract_strided_slice %228 {offsets = [0, 16], sizes = [16, 8], strides = [1, 1]} : vector<16x32xf32> to vector<16x8xf32>
    %cst_129 = arith.constant dense<0.000000e+00> : vector<16x16xf32>
    %268 = tpu.matmul %265, %266, %cst_129 {dimension_numbers = #tpu.dot_dimension_numbers<[1], [1], [0], [0], [0, 0, 1, 0], [], []>} : vector<16x8xf32>, vector<16x8xf32>, vector<16x16xf32> -> vector<16x16xf32>
    %cst_130 = arith.constant 0.353553385 : f32
    %269 = vector.broadcast %cst_130 : f32 to vector<16x16xf32>
    %270 = arith.mulf %268, %269 : vector<16x16xf32>
    %271 = arith.addf %270, %25 : vector<16x16xf32>
    %cst_131 = arith.constant dense<0xFF800000> : vector<16xf32>
    %272 = vector.multi_reduction <maximumf>, %271, %cst_131 [1] : vector<16x16xf32> to vector<16xf32>
    %273 = vector.shape_cast %272 : vector<16xf32> to vector<16x1xf32>
    %274 = vector.broadcast %273 : vector<16x1xf32> to vector<16x16xf32>
    %275 = arith.subf %271, %274 : vector<16x16xf32>
    %276 = math.exp %275 : vector<16x16xf32>
    %cst_132 = arith.constant dense<0.000000e+00> : vector<16xf32>
    %277 = vector.multi_reduction <add>, %276, %cst_132 [1] : vector<16x16xf32> to vector<16xf32>
    %278 = vector.shape_cast %277 : vector<16xf32> to vector<16x1xf32>
    %279 = tpu.reciprocal %278 {approx = true} : vector<16x1xf32> -> vector<16x1xf32>
    %280 = vector.broadcast %279 : vector<16x1xf32> to vector<16x16xf32>
    %281 = arith.mulf %276, %280 : vector<16x16xf32>
    %cst_133 = arith.constant dense<0.000000e+00> : vector<16x8xf32>
    %282 = tpu.matmul %281, %267, %cst_133 {dimension_numbers = #tpu.dot_dimension_numbers<[1], [0], [0], [1], [0, 0, 1, 1], [], []>} : vector<16x16xf32>, vector<16x8xf32>, vector<16x8xf32> -> vector<16x8xf32>
    %283 = vector.extract_strided_slice %214 {offsets = [0, 24], sizes = [16, 8], strides = [1, 1]} : vector<16x32xf32> to vector<16x8xf32>
    %284 = vector.extract_strided_slice %221 {offsets = [0, 24], sizes = [16, 8], strides = [1, 1]} : vector<16x32xf32> to vector<16x8xf32>
    %285 = vector.extract_strided_slice %228 {offsets = [0, 24], sizes = [16, 8], strides = [1, 1]} : vector<16x32xf32> to vector<16x8xf32>
    %cst_134 = arith.constant dense<0.000000e+00> : vector<16x16xf32>
    %286 = tpu.matmul %283, %284, %cst_134 {dimension_numbers = #tpu.dot_dimension_numbers<[1], [1], [0], [0], [0, 0, 1, 0], [], []>} : vector<16x8xf32>, vector<16x8xf32>, vector<16x16xf32> -> vector<16x16xf32>
    %cst_135 = arith.constant 0.353553385 : f32
    %287 = vector.broadcast %cst_135 : f32 to vector<16x16xf32>
    %288 = arith.mulf %286, %287 : vector<16x16xf32>
    %289 = arith.addf %288, %25 : vector<16x16xf32>
    %cst_136 = arith.constant dense<0xFF800000> : vector<16xf32>
    %290 = vector.multi_reduction <maximumf>, %289, %cst_136 [1] : vector<16x16xf32> to vector<16xf32>
    %291 = vector.shape_cast %290 : vector<16xf32> to vector<16x1xf32>
    %292 = vector.broadcast %291 : vector<16x1xf32> to vector<16x16xf32>
    %293 = arith.subf %289, %292 : vector<16x16xf32>
    %294 = math.exp %293 : vector<16x16xf32>
    %cst_137 = arith.constant dense<0.000000e+00> : vector<16xf32>
    %295 = vector.multi_reduction <add>, %294, %cst_137 [1] : vector<16x16xf32> to vector<16xf32>
    %296 = vector.shape_cast %295 : vector<16xf32> to vector<16x1xf32>
    %297 = tpu.reciprocal %296 {approx = true} : vector<16x1xf32> -> vector<16x1xf32>
    %298 = vector.broadcast %297 : vector<16x1xf32> to vector<16x16xf32>
    %299 = arith.mulf %294, %298 : vector<16x16xf32>
    %cst_138 = arith.constant dense<0.000000e+00> : vector<16x8xf32>
    %300 = tpu.matmul %299, %285, %cst_138 {dimension_numbers = #tpu.dot_dimension_numbers<[1], [0], [0], [1], [0, 0, 1, 1], [], []>} : vector<16x16xf32>, vector<16x8xf32>, vector<16x8xf32> -> vector<16x8xf32>
    %301 = tpu.concatenate %246, %264, %282, %300 in 1 : vector<16x8xf32>, vector<16x8xf32>, vector<16x8xf32>, vector<16x8xf32> -> vector<16x32xf32>
    %c1_139 = arith.constant 1 : index
    %c0_140 = arith.constant 0 : index
    %c0_141 = arith.constant 0 : index
    %302 = vector.load %arg10[%c1_139, %c0_140, %c0_141] : memref<2x32x32xf32, #tpu.memory_space<vmem>>, vector<1x32x32xf32>
    %303 = vector.shape_cast %302 : vector<1x32x32xf32> to vector<32x32xf32>
    %c1_142 = arith.constant 1 : index
    %c0_143 = arith.constant 0 : index
    %c0_144 = arith.constant 0 : index
    %304 = vector.load %arg11[%c1_142, %c0_143, %c0_144] : memref<2x1x32xf32, #tpu.memory_space<vmem>>, vector<1x1x32xf32>
    %305 = vector.shape_cast %304 : vector<1x1x32xf32> to vector<1x32xf32>
    %cst_145 = arith.constant dense<0.000000e+00> : vector<16x32xf32>
    %306 = tpu.matmul %301, %303, %cst_145 {dimension_numbers = #tpu.dot_dimension_numbers<[1], [0], [0], [1], [0, 0, 1, 1], [], []>} : vector<16x32xf32>, vector<32x32xf32>, vector<16x32xf32> -> vector<16x32xf32>
    %307 = vector.broadcast %305 : vector<1x32xf32> to vector<16x32xf32>
    %308 = arith.addf %306, %307 : vector<16x32xf32>
    %309 = arith.addf %207, %308 : vector<16x32xf32>
    %c1_146 = arith.constant 1 : index
    %c0_147 = arith.constant 0 : index
    %c0_148 = arith.constant 0 : index
    %310 = vector.load %arg12[%c1_146, %c0_147, %c0_148] : memref<2x1x32xf32, #tpu.memory_space<vmem>>, vector<1x1x32xf32>
    %311 = vector.shape_cast %310 : vector<1x1x32xf32> to vector<1x32xf32>
    %c1_149 = arith.constant 1 : index
    %c0_150 = arith.constant 0 : index
    %c0_151 = arith.constant 0 : index
    %312 = vector.load %arg13[%c1_149, %c0_150, %c0_151] : memref<2x1x32xf32, #tpu.memory_space<vmem>>, vector<1x1x32xf32>
    %313 = vector.shape_cast %312 : vector<1x1x32xf32> to vector<1x32xf32>
    %cst_152 = arith.constant dense<0.000000e+00> : vector<16xf32>
    %314 = vector.multi_reduction <add>, %309, %cst_152 [1] : vector<16x32xf32> to vector<16xf32>
    %315 = vector.shape_cast %314 : vector<16xf32> to vector<16x1xf32>
    %cst_153 = arith.constant 3.200000e+01 : f32
    %316 = vector.broadcast %cst_153 : f32 to vector<16x1xf32>
    %317 = arith.divf %315, %316 : vector<16x1xf32>
    %318 = vector.broadcast %317 : vector<16x1xf32> to vector<16x32xf32>
    %319 = arith.subf %309, %318 : vector<16x32xf32>
    %320 = arith.mulf %319, %319 : vector<16x32xf32>
    %cst_154 = arith.constant dense<0.000000e+00> : vector<16xf32>
    %321 = vector.multi_reduction <add>, %320, %cst_154 [1] : vector<16x32xf32> to vector<16xf32>
    %322 = vector.shape_cast %321 : vector<16xf32> to vector<16x1xf32>
    %cst_155 = arith.constant 3.200000e+01 : f32
    %323 = vector.broadcast %cst_155 : f32 to vector<16x1xf32>
    %324 = arith.divf %322, %323 : vector<16x1xf32>
    %325 = vector.broadcast %317 : vector<16x1xf32> to vector<16x32xf32>
    %326 = arith.subf %309, %325 : vector<16x32xf32>
    %cst_156 = arith.constant 9.99999996E-13 : f32
    %327 = vector.broadcast %cst_156 : f32 to vector<16x1xf32>
    %328 = arith.addf %324, %327 : vector<16x1xf32>
    %329 = math.rsqrt %328 : vector<16x1xf32>
    %330 = vector.broadcast %329 : vector<16x1xf32> to vector<16x32xf32>
    %331 = arith.mulf %326, %330 : vector<16x32xf32>
    %332 = vector.broadcast %311 : vector<1x32xf32> to vector<16x32xf32>
    %333 = arith.mulf %331, %332 : vector<16x32xf32>
    %334 = vector.broadcast %313 : vector<1x32xf32> to vector<16x32xf32>
    %335 = arith.addf %333, %334 : vector<16x32xf32>
    %c1_157 = arith.constant 1 : index
    %c0_158 = arith.constant 0 : index
    %c0_159 = arith.constant 0 : index
    %336 = vector.load %arg14[%c1_157, %c0_158, %c0_159] : memref<2x32x64xf32, #tpu.memory_space<vmem>>, vector<1x32x64xf32>
    %337 = vector.shape_cast %336 : vector<1x32x64xf32> to vector<32x64xf32>
    %c1_160 = arith.constant 1 : index
    %c0_161 = arith.constant 0 : index
    %c0_162 = arith.constant 0 : index
    %338 = vector.load %arg15[%c1_160, %c0_161, %c0_162] : memref<2x1x64xf32, #tpu.memory_space<vmem>>, vector<1x1x64xf32>
    %339 = vector.shape_cast %338 : vector<1x1x64xf32> to vector<1x64xf32>
    %cst_163 = arith.constant dense<0.000000e+00> : vector<16x64xf32>
    %340 = tpu.matmul %335, %337, %cst_163 {dimension_numbers = #tpu.dot_dimension_numbers<[1], [0], [0], [1], [0, 0, 1, 1], [], []>} : vector<16x32xf32>, vector<32x64xf32>, vector<16x64xf32> -> vector<16x64xf32>
    %341 = vector.broadcast %339 : vector<1x64xf32> to vector<16x64xf32>
    %342 = arith.addf %340, %341 : vector<16x64xf32>
    %cst_164 = arith.constant 5.000000e-01 : f32
    %343 = vector.broadcast %cst_164 : f32 to vector<16x64xf32>
    %344 = arith.mulf %343, %342 : vector<16x64xf32>
    %cst_165 = arith.constant 4.471500e-02 : f32
    %345 = vector.broadcast %cst_165 : f32 to vector<16x64xf32>
    %346 = arith.mulf %345, %342 : vector<16x64xf32>
    %347 = arith.mulf %346, %342 : vector<16x64xf32>
    %348 = arith.mulf %347, %342 : vector<16x64xf32>
    %349 = arith.addf %342, %348 : vector<16x64xf32>
    %cst_166 = arith.constant 0.797884583 : f32
    %350 = vector.broadcast %cst_166 : f32 to vector<16x64xf32>
    %351 = arith.mulf %350, %349 : vector<16x64xf32>
    %352 = math.tanh %351 : vector<16x64xf32>
    %cst_167 = arith.constant 1.000000e+00 : f32
    %353 = vector.broadcast %cst_167 : f32 to vector<16x64xf32>
    %354 = arith.addf %353, %352 : vector<16x64xf32>
    %355 = arith.mulf %344, %354 : vector<16x64xf32>
    %c1_168 = arith.constant 1 : index
    %c0_169 = arith.constant 0 : index
    %c0_170 = arith.constant 0 : index
    %356 = vector.load %arg16[%c1_168, %c0_169, %c0_170] : memref<2x64x32xf32, #tpu.memory_space<vmem>>, vector<1x64x32xf32>
    %357 = vector.shape_cast %356 : vector<1x64x32xf32> to vector<64x32xf32>
    %c1_171 = arith.constant 1 : index
    %c0_172 = arith.constant 0 : index
    %c0_173 = arith.constant 0 : index
    %358 = vector.load %arg17[%c1_171, %c0_172, %c0_173] : memref<2x1x32xf32, #tpu.memory_space<vmem>>, vector<1x1x32xf32>
    %359 = vector.shape_cast %358 : vector<1x1x32xf32> to vector<1x32xf32>
    %cst_174 = arith.constant dense<0.000000e+00> : vector<16x32xf32>
    %360 = tpu.matmul %355, %357, %cst_174 {dimension_numbers = #tpu.dot_dimension_numbers<[1], [0], [0], [1], [0, 0, 1, 1], [], []>} : vector<16x64xf32>, vector<64x32xf32>, vector<16x32xf32> -> vector<16x32xf32>
    %361 = vector.broadcast %359 : vector<1x32xf32> to vector<16x32xf32>
    %362 = arith.addf %360, %361 : vector<16x32xf32>
    %363 = arith.addf %335, %362 : vector<16x32xf32>
    %c1_175 = arith.constant 1 : index
    %c0_176 = arith.constant 0 : index
    %c0_177 = arith.constant 0 : index
    %364 = vector.load %arg18[%c1_175, %c0_176, %c0_177] : memref<2x1x32xf32, #tpu.memory_space<vmem>>, vector<1x1x32xf32>
    %365 = vector.shape_cast %364 : vector<1x1x32xf32> to vector<1x32xf32>
    %c1_178 = arith.constant 1 : index
    %c0_179 = arith.constant 0 : index
    %c0_180 = arith.constant 0 : index
    %366 = vector.load %arg19[%c1_178, %c0_179, %c0_180] : memref<2x1x32xf32, #tpu.memory_space<vmem>>, vector<1x1x32xf32>
    %367 = vector.shape_cast %366 : vector<1x1x32xf32> to vector<1x32xf32>
    %cst_181 = arith.constant dense<0.000000e+00> : vector<16xf32>
    %368 = vector.multi_reduction <add>, %363, %cst_181 [1] : vector<16x32xf32> to vector<16xf32>
    %369 = vector.shape_cast %368 : vector<16xf32> to vector<16x1xf32>
    %cst_182 = arith.constant 3.200000e+01 : f32
    %370 = vector.broadcast %cst_182 : f32 to vector<16x1xf32>
    %371 = arith.divf %369, %370 : vector<16x1xf32>
    %372 = vector.broadcast %371 : vector<16x1xf32> to vector<16x32xf32>
    %373 = arith.subf %363, %372 : vector<16x32xf32>
    %374 = arith.mulf %373, %373 : vector<16x32xf32>
    %cst_183 = arith.constant dense<0.000000e+00> : vector<16xf32>
    %375 = vector.multi_reduction <add>, %374, %cst_183 [1] : vector<16x32xf32> to vector<16xf32>
    %376 = vector.shape_cast %375 : vector<16xf32> to vector<16x1xf32>
    %cst_184 = arith.constant 3.200000e+01 : f32
    %377 = vector.broadcast %cst_184 : f32 to vector<16x1xf32>
    %378 = arith.divf %376, %377 : vector<16x1xf32>
    %379 = vector.broadcast %371 : vector<16x1xf32> to vector<16x32xf32>
    %380 = arith.subf %363, %379 : vector<16x32xf32>
    %cst_185 = arith.constant 9.99999996E-13 : f32
    %381 = vector.broadcast %cst_185 : f32 to vector<16x1xf32>
    %382 = arith.addf %378, %381 : vector<16x1xf32>
    %383 = math.rsqrt %382 : vector<16x1xf32>
    %384 = vector.broadcast %383 : vector<16x1xf32> to vector<16x32xf32>
    %385 = arith.mulf %380, %384 : vector<16x32xf32>
    %386 = vector.broadcast %365 : vector<1x32xf32> to vector<16x32xf32>
    %387 = arith.mulf %385, %386 : vector<16x32xf32>
    %388 = vector.broadcast %367 : vector<1x32xf32> to vector<16x32xf32>
    %389 = arith.addf %387, %388 : vector<16x32xf32>
    %c0_186 = arith.constant 0 : index
    %c0_187 = arith.constant 0 : index
    %390 = vector.load %arg20[%c0_186, %c0_187] : memref<32x1xf32, #tpu.memory_space<vmem>>, vector<32x1xf32>
    %cst_188 = arith.constant dense<0.000000e+00> : vector<16x1xf32>
    %391 = tpu.matmul %389, %390, %cst_188 {dimension_numbers = #tpu.dot_dimension_numbers<[1], [0], [0], [1], [0, 0, 1, 1], [], []>} : vector<16x32xf32>, vector<32x1xf32>, vector<16x1xf32> -> vector<16x1xf32>
    %c0_189 = arith.constant 0 : index
    %c0_190 = arith.constant 0 : index
    %392 = vector.load %arg21[%c0_189, %c0_190] : memref<1x1xf32, #tpu.memory_space<vmem>>, vector<1x1xf32>
    %393 = vector.broadcast %392 : vector<1x1xf32> to vector<16x1xf32>
    %394 = arith.addf %391, %393 : vector<16x1xf32>
    %395 = vector.extract_strided_slice %394 {offsets = [0, 0], sizes = [8, 1], strides = [1, 1]} : vector<16x1xf32> to vector<8x1xf32>
    %396 = vector.extract_strided_slice %394 {offsets = [8, 0], sizes = [8, 1], strides = [1, 1]} : vector<16x1xf32> to vector<8x1xf32>
    %cst_191 = arith.constant 0.000000e+00 : f32
    %397 = vector.broadcast %cst_191 : f32 to vector<8x1xf32>
    %398 = arith.addf %397, %395 : vector<8x1xf32>
    %399 = arith.addf %398, %396 : vector<8x1xf32>
    %cst_192 = arith.constant 2.000000e+00 : f32
    %400 = vector.broadcast %cst_192 : f32 to vector<8x1xf32>
    %401 = arith.divf %399, %400 : vector<8x1xf32>
    %402 = arith.subf %395, %401 : vector<8x1xf32>
    %403 = arith.mulf %402, %402 : vector<8x1xf32>
    %cst_193 = arith.constant 0.000000e+00 : f32
    %404 = vector.broadcast %cst_193 : f32 to vector<8x1xf32>
    %405 = arith.addf %404, %403 : vector<8x1xf32>
    %406 = arith.subf %396, %401 : vector<8x1xf32>
    %407 = arith.mulf %406, %406 : vector<8x1xf32>
    %408 = arith.addf %405, %407 : vector<8x1xf32>
    %cst_194 = arith.constant 2.000000e+00 : f32
    %409 = vector.broadcast %cst_194 : f32 to vector<8x1xf32>
    %410 = arith.divf %408, %409 : vector<8x1xf32>
    %cst_195 = arith.constant 9.99999974E-6 : f32
    %411 = vector.broadcast %cst_195 : f32 to vector<8x1xf32>
    %412 = arith.addf %410, %411 : vector<8x1xf32>
    %413 = math.rsqrt %412 : vector<8x1xf32>
    %c0_196 = arith.constant 0 : index
    %c0_197 = arith.constant 0 : index
    %414 = vector.load %arg22[%c0_196, %c0_197] : memref<8x1xf32, #tpu.memory_space<vmem>>, vector<8x1xf32>
    %c0_198 = arith.constant 0 : index
    %c0_199 = arith.constant 0 : index
    %415 = vector.load %arg23[%c0_198, %c0_199] : memref<8x1xf32, #tpu.memory_space<vmem>>, vector<8x1xf32>
    %416 = arith.subf %395, %401 : vector<8x1xf32>
    %417 = arith.mulf %416, %413 : vector<8x1xf32>
    %418 = arith.mulf %417, %414 : vector<8x1xf32>
    %419 = arith.addf %418, %415 : vector<8x1xf32>
    %c0_200 = arith.constant 0 : index
    %c0_201 = arith.constant 0 : index
    %c0_202 = arith.constant 0 : index
    %420 = vector.load %arg24[%c0_200, %c0_201, %c0_202] : memref<2x8x1xf32, #tpu.memory_space<vmem>>, vector<1x8x1xf32>
    %421 = vector.shape_cast %420 : vector<1x8x1xf32> to vector<8x1xf32>
    %422 = vector.shape_cast %419 : vector<8x1xf32> to vector<1x8x1xf32>
    tpu.vector_store %arg24[%c0_200, %c0_201, %c0_202], %422 {strides = array<i32>} : memref<2x8x1xf32, #tpu.memory_space<vmem>>, vector<1x8x1xf32>,
    %423 = arith.subf %396, %401 : vector<8x1xf32>
    %424 = arith.mulf %423, %413 : vector<8x1xf32>
    %425 = arith.mulf %424, %414 : vector<8x1xf32>
    %426 = arith.addf %425, %415 : vector<8x1xf32>
    %c1_203 = arith.constant 1 : index
    %c0_204 = arith.constant 0 : index
    %c0_205 = arith.constant 0 : index
    %427 = vector.load %arg24[%c1_203, %c0_204, %c0_205] : memref<2x8x1xf32, #tpu.memory_space<vmem>>, vector<1x8x1xf32>
    %428 = vector.shape_cast %427 : vector<1x8x1xf32> to vector<8x1xf32>
    %429 = vector.shape_cast %426 : vector<8x1xf32> to vector<1x8x1xf32>
    tpu.vector_store %arg24[%c1_203, %c0_204, %c0_205], %429 {strides = array<i32>} : memref<2x8x1xf32, #tpu.memory_space<vmem>>, vector<1x8x1xf32>,
    return
  }
}

</mosaic_0001>

<llo_original>
// kernel: tpu_custom_call.1
$region0: #{tpu_custom_call.1}
  #allocation0 [shape = 'u32[]', space=smem, size = 0x4, offset = 0x4, fixed_abs, tag = 'smem constant byte address 0x4 - core index']
  #allocation1 [shape = 'u32[72,128]{1,0:T(1,128)}', space=vmem, size = 0x9000, scoped, tag = 'internal scratch']
  #allocation2 [shape = 'f32[1,1]{1,0:T(1,128)S(1)}', space=vmem, size = 0x200, scoped, tag = 'scoped memory for tpu_custom_call.1']
  %s0 = inlined_call_operand.hbm [shape: f32[16,32], index: 0, kind: input, shape index: {}]
  %s1 = inlined_call_operand.hbm [shape: f32[16,16], index: 1, kind: input, shape index: {}]
  %s2 = inlined_call_operand.hbm [shape: f32[1,32], index: 2, kind: input, shape index: {}]
  %s3 = inlined_call_operand.hbm [shape: f32[1,32], index: 3, kind: input, shape index: {}]
  %s4 = inlined_call_operand.vmem [shape: f32[2,32,32], index: 4, kind: input, shape index: {}]
  %s5 = inlined_call_operand.vmem [shape: f32[2,1,32], index: 5, kind: input, shape index: {}]
  %s6 = inlined_call_operand.vmem [shape: f32[2,32,32], index: 6, kind: input, shape index: {}]
  %s7 = inlined_call_operand.hbm [shape: f32[2,1,32], index: 7, kind: input, shape index: {}]
  %s8 = inlined_call_operand.vmem [shape: f32[2,32,32], index: 8, kind: input, shape index: {}]
  %s9 = inlined_call_operand.hbm [shape: f32[2,1,32], index: 9, kind: input, shape index: {}]
  %s10 = inlined_call_operand.hbm [shape: f32[2,32,32], index: 10, kind: input, shape index: {}]
  %s11 = inlined_call_operand.hbm [shape: f32[2,1,32], index: 11, kind: input, shape index: {}]
  %s12 = inlined_call_operand.hbm [shape: f32[2,1,32], index: 12, kind: input, shape index: {}]
  %s13 = inlined_call_operand.hbm [shape: f32[2,1,32], index: 13, kind: input, shape index: {}]
  %s14 = inlined_call_operand.hbm [shape: f32[2,32,64], index: 14, kind: input, shape index: {}]
  %s15 = inlined_call_operand.hbm [shape: f32[2,1,64], index: 15, kind: input, shape index: {}]
  %s16 = inlined_call_operand.vmem [shape: f32[2,64,32], index: 16, kind: input, shape index: {}]
  %s17 = inlined_call_operand.hbm [shape: f32[2,1,32], index: 17, kind: input, shape index: {}]
  %s18 = inlined_call_operand.hbm [shape: f32[2,1,32], index: 18, kind: input, shape index: {}]
  %s19 = inlined_call_operand.vmem [shape: f32[2,1,32], index: 19, kind: input, shape index: {}]
  %s20 = inlined_call_operand.vmem [shape: f32[32,1], index: 20, kind: input, shape index: {}]
  %s21 = inlined_call_operand.<no memory space> [shape: f32[1,1], index: 21, kind: input, shape index: {}]
  %s22 = inlined_call_operand.vmem [shape: f32[8,1], index: 22, kind: input, shape index: {}]
  %s23 = inlined_call_operand.vmem [shape: f32[8,1], index: 23, kind: input, shape index: {}]
  %s24 = inlined_call_operand.vmem [shape: f32[2,8,1], index: 24, kind: output, shape index: {}]
  %s25 = sld [smem:[#allocation0]]
  $region162: #{tpu_custom_call.1} parent=0
    _
  %s27 = ssub.s32 1, %s25
  %s28 = scalar_select 0, %s27, %s25
  %v29 = vstv %s21
  %30 = vst [vmem:[#allocation2] sm:$0x1] %v29
  $region1: #{tpu_custom_call.1} parent=0
    #allocation3 [shape = 'u8[8192]{0}', space=vmem, size = 0x2000, scoped, tag = 'input window, operand 0, single buffered']
    #allocation4 [shape = 's32[1]{0}', space=sflag, size = 0x4, scoped, tag = 'scoped memory for tpu_custom_call.1']
    #allocation5 [shape = 'u8[8192]{0}', space=vmem, size = 0x2000, scoped, tag = 'input window, operand 1, single buffered']
    #allocation6 [shape = 's32[1]{0}', space=sflag, size = 0x4, scoped, tag = 'scoped memory for tpu_custom_call.1']
    #allocation7 [shape = 'u8[512]{0}', space=vmem, size = 0x400, scoped, tag = 'input window, operand 2, single buffered']
    #allocation8 [shape = 'u8[512]{0}', space=vmem, size = 0x400, scoped, tag = 'input window, operand 3, single buffered']
    #allocation9 [shape = 's32[1]{0}', space=sflag, size = 0x4, scoped, tag = 'scoped memory for tpu_custom_call.1']
    #allocation10 [shape = 'u8[1024]{0}', space=vmem, size = 0x400, scoped, tag = 'input window, operand 7, single buffered']
    #allocation11 [shape = 'u8[1024]{0}', space=vmem, size = 0x400, scoped, tag = 'input window, operand 9, single buffered']
    #allocation12 [shape = 's32[1]{0}', space=sflag, size = 0x4, scoped, tag = 'scoped memory for tpu_custom_call.1']
    #allocation13 [shape = 'u8[32768]{0}', space=vmem, size = 0x8000, scoped, tag = 'input window, operand 10, single buffered']
    #allocation14 [shape = 'u8[1024]{0}', space=vmem, size = 0x400, scoped, tag = 'input window, operand 11, single buffered']
    #allocation15 [shape = 's32[1]{0}', space=sflag, size = 0x4, scoped, tag = 'scoped memory for tpu_custom_call.1']
    #allocation16 [shape = 'u8[1024]{0}', space=vmem, size = 0x400, scoped, tag = 'input window, operand 12, single buffered']
    #allocation17 [shape = 'u8[1024]{0}', space=vmem, size = 0x400, scoped, tag = 'input window, operand 13, single buffered']
    #allocation18 [shape = 's32[1]{0}', space=sflag, size = 0x4, scoped, tag = 'scoped memory for tpu_custom_call.1']
    #allocation19 [shape = 'u8[32768]{0}', space=vmem, size = 0x8000, scoped, tag = 'input window, operand 14, single buffered']
    #allocation20 [shape = 'u8[1024]{0}', space=vmem, size = 0x400, scoped, tag = 'input window, operand 15, single buffered']
    #allocation21 [shape = 's32[1]{0}', space=sflag, size = 0x4, scoped, tag = 'scoped memory for tpu_custom_call.1']
    #allocation22 [shape = 'u8[1024]{0}', space=vmem, size = 0x400, scoped, tag = 'input window, operand 17, single buffered']
    #allocation23 [shape = 'u8[1024]{0}', space=vmem, size = 0x400, scoped, tag = 'input window, operand 18, single buffered']
    #allocation24 [shape = 's32[1]{0}', space=sflag, size = 0x4, scoped, tag = 'scoped memory for tpu_custom_call.1']
    %31 = vsyncpa [#allocation4], 0
    %32 = vsyncpa [#allocation6], 0
    %33 = vsyncpa [#allocation9], 0
    %34 = vsyncpa [#allocation12], 0
    %35 = vsyncpa [#allocation15], 0
    %36 = vsyncpa [#allocation18], 0
    %37 = vsyncpa [#allocation21], 0
    %38 = vsyncpa [#allocation24], 0
    // Predicated region
    $region2: #{tpu_custom_call.1} parent=1 // pred_check
      _
    $region3: #{tpu_custom_call.1} parent=1 // pred_check_branch
      %40 = sbr.rel (0) target = $region5
    $region4: #{tpu_custom_call.1} parent=1 // pred_region
      %42 = vsyncadd [#allocation4], 0
      %s43 = sshll.u32 %s0, 4
      %s44 = int_to_ptr.hbm [resolvable:$true] %s43
      %s45 = sshll.u32 [#allocation3], 4
      %s46 = int_to_ptr.vmem [resolvable:$true] %s45
      %51 = dma.hbm_to_vmem [thread:$0]  %s44, 256, %s46, [#allocation4], 128, 128, 8
    $region5: #{tpu_custom_call.1} parent=1 // pred_fallthru
      _
    // Predicated region
    $region6: #{tpu_custom_call.1} parent=1 // pred_check
      _
    $region7: #{tpu_custom_call.1} parent=1 // pred_check_branch
      %53 = sbr.rel (0) target = $region9
    $region8: #{tpu_custom_call.1} parent=1 // pred_region
      %55 = vsyncadd [#allocation6], 0
      %s56 = sshll.u32 %s1, 4
      %s57 = int_to_ptr.hbm [resolvable:$true] %s56
      %s58 = sshll.u32 [#allocation5], 4
      %s59 = int_to_ptr.vmem [resolvable:$true] %s58
      %64 = dma.hbm_to_vmem [thread:$0]  %s57, 256, %s59, [#allocation6], 128, 128, 8
    $region9: #{tpu_custom_call.1} parent=1 // pred_fallthru
      _
    // Predicated region
    $region10: #{tpu_custom_call.1} parent=1 // pred_check
      _
    $region11: #{tpu_custom_call.1} parent=1 // pred_check_branch
      %66 = sbr.rel (0) target = $region13
    $region12: #{tpu_custom_call.1} parent=1 // pred_region
      %68 = vsyncadd [#allocation6], 0
      %s70 = sshll.u32 %s2, 4
      %s71 = int_to_ptr.hbm [resolvable:$true] %s70
      %s72 = sshll.u32 [#allocation7], 4
      %s73 = int_to_ptr.vmem [resolvable:$true] %s72
      %75 = dma.hbm_to_vmem [thread:$0]  %s71, 16, %s73, [#allocation6]
    $region13: #{tpu_custom_call.1} parent=1 // pred_fallthru
      _
    // Predicated region
    $region14: #{tpu_custom_call.1} parent=1 // pred_check
      _
    $region15: #{tpu_custom_call.1} parent=1 // pred_check_branch
      %77 = sbr.rel (0) target = $region17
    $region16: #{tpu_custom_call.1} parent=1 // pred_region
      %79 = vsyncadd [#allocation9], 0
      %s81 = sshll.u32 %s3, 4
      %s82 = int_to_ptr.hbm [resolvable:$true] %s81
      %s83 = sshll.u32 [#allocation8], 4
      %s84 = int_to_ptr.vmem [resolvable:$true] %s83
      %86 = dma.hbm_to_vmem [thread:$0]  %s82, 16, %s84, [#allocation9]
    $region17: #{tpu_custom_call.1} parent=1 // pred_fallthru
      _
    // Predicated region
    $region18: #{tpu_custom_call.1} parent=1 // pred_check
      _
    $region19: #{tpu_custom_call.1} parent=1 // pred_check_branch
      %88 = sbr.rel (0) target = $region21
    $region20: #{tpu_custom_call.1} parent=1 // pred_region
      _
    $region21: #{tpu_custom_call.1} parent=1 // pred_fallthru
      _
    // Predicated region
    $region22: #{tpu_custom_call.1} parent=1 // pred_check
      _
    $region23: #{tpu_custom_call.1} parent=1 // pred_check_branch
      %90 = sbr.rel (0) target = $region25
    $region24: #{tpu_custom_call.1} parent=1 // pred_region
      _
    $region25: #{tpu_custom_call.1} parent=1 // pred_fallthru
      _
    // Predicated region
    $region26: #{tpu_custom_call.1} parent=1 // pred_check
      _
    $region27: #{tpu_custom_call.1} parent=1 // pred_check_branch
      %92 = sbr.rel (0) target = $region29
    $region28: #{tpu_custom_call.1} parent=1 // pred_region
      _
    $region29: #{tpu_custom_call.1} parent=1 // pred_fallthru
      _
    // Predicated region
    $region30: #{tpu_custom_call.1} parent=1 // pred_check
      _
    $region31: #{tpu_custom_call.1} parent=1 // pred_check_branch
      %94 = sbr.rel (0) target = $region33
    $region32: #{tpu_custom_call.1} parent=1 // pred_region
      %96 = vsyncadd [#allocation9], 0
      %s97 = sshll.u32 %s7, 4
      %s98 = int_to_ptr.hbm [resolvable:$true] %s97
      %s99 = sshll.u32 [#allocation10], 4
      %s100 = int_to_ptr.vmem [resolvable:$true] %s99
      %105 = dma.hbm_to_vmem [thread:$0]  %s98, 32, %s100, [#allocation9], 16, 16, 1
    $region33: #{tpu_custom_call.1} parent=1 // pred_fallthru
      _
    // Predicated region
    $region34: #{tpu_custom_call.1} parent=1 // pred_check
      _
    $region35: #{tpu_custom_call.1} parent=1 // pred_check_branch
      %107 = sbr.rel (0) target = $region37
    $region36: #{tpu_custom_call.1} parent=1 // pred_region
      _
    $region37: #{tpu_custom_call.1} parent=1 // pred_fallthru
      _
    // Predicated region
    $region38: #{tpu_custom_call.1} parent=1 // pred_check
      _
    $region39: #{tpu_custom_call.1} parent=1 // pred_check_branch
      %109 = sbr.rel (0) target = $region41
    $region40: #{tpu_custom_call.1} parent=1 // pred_region
      %111 = vsyncadd [#allocation12], 0
      %s112 = sshll.u32 %s9, 4
      %s113 = int_to_ptr.hbm [resolvable:$true] %s112
      %s114 = sshll.u32 [#allocation11], 4
      %s115 = int_to_ptr.vmem [resolvable:$true] %s114
      %120 = dma.hbm_to_vmem [thread:$0]  %s113, 32, %s115, [#allocation12], 16, 16, 1
    $region41: #{tpu_custom_call.1} parent=1 // pred_fallthru
      _
    // Predicated region
    $region42: #{tpu_custom_call.1} parent=1 // pred_check
      _
    $region43: #{tpu_custom_call.1} parent=1 // pred_check_branch
      %122 = sbr.rel (0) target = $region45
    $region44: #{tpu_custom_call.1} parent=1 // pred_region
      %124 = vsyncadd [#allocation12], 0
      %s125 = sshll.u32 %s10, 4
      %s126 = int_to_ptr.hbm [resolvable:$true] %s125
      %s127 = sshll.u32 [#allocation13], 4
      %s128 = int_to_ptr.vmem [resolvable:$true] %s127
      %133 = dma.hbm_to_vmem [thread:$0]  %s126, 1024, %s128, [#allocation12], 128, 128, 8
    $region45: #{tpu_custom_call.1} parent=1 // pred_fallthru
      _
    // Predicated region
    $region46: #{tpu_custom_call.1} parent=1 // pred_check
      _
    $region47: #{tpu_custom_call.1} parent=1 // pred_check_branch
      %135 = sbr.rel (0) target = $region49
    $region48: #{tpu_custom_call.1} parent=1 // pred_region
      %137 = vsyncadd [#allocation15], 0
      %s138 = sshll.u32 %s11, 4
      %s139 = int_to_ptr.hbm [resolvable:$true] %s138
      %s140 = sshll.u32 [#allocation14], 4
      %s141 = int_to_ptr.vmem [resolvable:$true] %s140
      %146 = dma.hbm_to_vmem [thread:$0]  %s139, 32, %s141, [#allocation15], 16, 16, 1
    $region49: #{tpu_custom_call.1} parent=1 // pred_fallthru
      _
    // Predicated region
    $region50: #{tpu_custom_call.1} parent=1 // pred_check
      _
    $region51: #{tpu_custom_call.1} parent=1 // pred_check_branch
      %148 = sbr.rel (0) target = $region53
    $region52: #{tpu_custom_call.1} parent=1 // pred_region
      %150 = vsyncadd [#allocation15], 0
      %s151 = sshll.u32 %s12, 4
      %s152 = int_to_ptr.hbm [resolvable:$true] %s151
      %s153 = sshll.u32 [#allocation16], 4
      %s154 = int_to_ptr.vmem [resolvable:$true] %s153
      %159 = dma.hbm_to_vmem [thread:$0]  %s152, 32, %s154, [#allocation15], 16, 16, 1
    $region53: #{tpu_custom_call.1} parent=1 // pred_fallthru
      _
    // Predicated region
    $region54: #{tpu_custom_call.1} parent=1 // pred_check
      _
    $region55: #{tpu_custom_call.1} parent=1 // pred_check_branch
      %161 = sbr.rel (0) target = $region57
    $region56: #{tpu_custom_call.1} parent=1 // pred_region
      %163 = vsyncadd [#allocation18], 0
      %s164 = sshll.u32 %s13, 4
      %s165 = int_to_ptr.hbm [resolvable:$true] %s164
      %s166 = sshll.u32 [#allocation17], 4
      %s167 = int_to_ptr.vmem [resolvable:$true] %s166
      %172 = dma.hbm_to_vmem [thread:$0]  %s165, 32, %s167, [#allocation18], 16, 16, 1
    $region57: #{tpu_custom_call.1} parent=1 // pred_fallthru
      _
    // Predicated region
    $region58: #{tpu_custom_call.1} parent=1 // pred_check
      _
    $region59: #{tpu_custom_call.1} parent=1 // pred_check_branch
      %174 = sbr.rel (0) target = $region61
    $region60: #{tpu_custom_call.1} parent=1 // pred_region
      %176 = vsyncadd [#allocation18], 0
      %s177 = sshll.u32 %s14, 4
      %s178 = int_to_ptr.hbm [resolvable:$true] %s177
      %s179 = sshll.u32 [#allocation19], 4
      %s180 = int_to_ptr.vmem [resolvable:$true] %s179
      %185 = dma.hbm_to_vmem [thread:$0]  %s178, 1024, %s180, [#allocation18], 128, 128, 8
    $region61: #{tpu_custom_call.1} parent=1 // pred_fallthru
      _
    // Predicated region
    $region62: #{tpu_custom_call.1} parent=1 // pred_check
      _
    $region63: #{tpu_custom_call.1} parent=1 // pred_check_branch
      %187 = sbr.rel (0) target = $region65
    $region64: #{tpu_custom_call.1} parent=1 // pred_region
      %189 = vsyncadd [#allocation21], 0
      %s190 = sshll.u32 %s15, 4
      %s191 = int_to_ptr.hbm [resolvable:$true] %s190
      %s192 = sshll.u32 [#allocation20], 4
      %s193 = int_to_ptr.vmem [resolvable:$true] %s192
      %198 = dma.hbm_to_vmem [thread:$0]  %s191, 32, %s193, [#allocation21], 16, 16, 1
    $region65: #{tpu_custom_call.1} parent=1 // pred_fallthru
      _
    // Predicated region
    $region66: #{tpu_custom_call.1} parent=1 // pred_check
      _
    $region67: #{tpu_custom_call.1} parent=1 // pred_check_branch
      %200 = sbr.rel (0) target = $region69
    $region68: #{tpu_custom_call.1} parent=1 // pred_region
      _
    $region69: #{tpu_custom_call.1} parent=1 // pred_fallthru
      _
    // Predicated region
    $region70: #{tpu_custom_call.1} parent=1 // pred_check
      _
    $region71: #{tpu_custom_call.1} parent=1 // pred_check_branch
      %202 = sbr.rel (0) target = $region73
    $region72: #{tpu_custom_call.1} parent=1 // pred_region
      %204 = vsyncadd [#allocation21], 0
      %s205 = sshll.u32 %s17, 4
      %s206 = int_to_ptr.hbm [resolvable:$true] %s205
      %s207 = sshll.u32 [#allocation22], 4
      %s208 = int_to_ptr.vmem [resolvable:$true] %s207
      %213 = dma.hbm_to_vmem [thread:$0]  %s206, 32, %s208, [#allocation21], 16, 16, 1
    $region73: #{tpu_custom_call.1} parent=1 // pred_fallthru
      _
    // Predicated region
    $region74: #{tpu_custom_call.1} parent=1 // pred_check
      _
    $region75: #{tpu_custom_call.1} parent=1 // pred_check_branch
      %215 = sbr.rel (0) target = $region77
    $region76: #{tpu_custom_call.1} parent=1 // pred_region
      %217 = vsyncadd [#allocation24], 0
      %s218 = sshll.u32 %s18, 4
      %s219 = int_to_ptr.hbm [resolvable:$true] %s218
      %s220 = sshll.u32 [#allocation23], 4
      %s221 = int_to_ptr.vmem [resolvable:$true] %s220
      %226 = dma.hbm_to_vmem [thread:$0]  %s219, 32, %s221, [#allocation24], 16, 16, 1
    $region77: #{tpu_custom_call.1} parent=1 // pred_fallthru
      _
    // Predicated region
    $region78: #{tpu_custom_call.1} parent=1 // pred_check
      _
    $region79: #{tpu_custom_call.1} parent=1 // pred_check_branch
      %228 = sbr.rel (0) target = $region81
    $region80: #{tpu_custom_call.1} parent=1 // pred_region
      _
    $region81: #{tpu_custom_call.1} parent=1 // pred_fallthru
      _
    // Predicated region
    $region82: #{tpu_custom_call.1} parent=1 // pred_check
      _
    $region83: #{tpu_custom_call.1} parent=1 // pred_check_branch
      %230 = sbr.rel (0) target = $region85
    $region84: #{tpu_custom_call.1} parent=1 // pred_region
      _
    $region85: #{tpu_custom_call.1} parent=1 // pred_fallthru
      _
    // Predicated region
    $region86: #{tpu_custom_call.1} parent=1 // pred_check
      _
    $region87: #{tpu_custom_call.1} parent=1 // pred_check_branch
      %232 = sbr.rel (0) target = $region89
    $region88: #{tpu_custom_call.1} parent=1 // pred_region
      _
    $region89: #{tpu_custom_call.1} parent=1 // pred_fallthru
      _
    // Predicated region
    $region90: #{tpu_custom_call.1} parent=1 // pred_check
      _
    $region91: #{tpu_custom_call.1} parent=1 // pred_check_branch
      %234 = sbr.rel (0) target = $region93
    $region92: #{tpu_custom_call.1} parent=1 // pred_region
      _
    $region93: #{tpu_custom_call.1} parent=1 // pred_fallthru
      _
    // Predicated region
    $region94: #{tpu_custom_call.1} parent=1 // pred_check
      _
    $region95: #{tpu_custom_call.1} parent=1 // pred_check_branch
      %236 = sbr.rel (0) target = $region97
    $region96: #{tpu_custom_call.1} parent=1 // pred_region
      _
    $region97: #{tpu_custom_call.1} parent=1 // pred_fallthru
      _
    // Predicated region
    $region98: #{tpu_custom_call.1} parent=1 // pred_check
      _
    $region99: #{tpu_custom_call.1} parent=1 // pred_check_branch
      %238 = sbr.rel (0) target = $region101
    $region100: #{tpu_custom_call.1} parent=1 // pred_region
      %240 = dma.done [#allocation4], 256
    $region101: #{tpu_custom_call.1} parent=1 // pred_fallthru
      _
    // Predicated region
    $region102: #{tpu_custom_call.1} parent=1 // pred_check
      _
    $region103: #{tpu_custom_call.1} parent=1 // pred_check_branch
      %242 = sbr.rel (0) target = $region105
    $region104: #{tpu_custom_call.1} parent=1 // pred_region
      %244 = dma.done [#allocation6], 256
    $region105: #{tpu_custom_call.1} parent=1 // pred_fallthru
      _
    // Predicated region
    $region106: #{tpu_custom_call.1} parent=1 // pred_check
      _
    $region107: #{tpu_custom_call.1} parent=1 // pred_check_branch
      %246 = sbr.rel (0) target = $region109
    $region108: #{tpu_custom_call.1} parent=1 // pred_region
      %248 = dma.done [#allocation6], 16
    $region109: #{tpu_custom_call.1} parent=1 // pred_fallthru
      _
    // Predicated region
    $region110: #{tpu_custom_call.1} parent=1 // pred_check
      _
    $region111: #{tpu_custom_call.1} parent=1 // pred_check_branch
      %250 = sbr.rel (0) target = $region113
    $region112: #{tpu_custom_call.1} parent=1 // pred_region
      %252 = dma.done [#allocation9], 16
    $region113: #{tpu_custom_call.1} parent=1 // pred_fallthru
      _
    // Predicated region
    $region114: #{tpu_custom_call.1} parent=1 // pred_check
      _
    $region115: #{tpu_custom_call.1} parent=1 // pred_check_branch
      %254 = sbr.rel (0) target = $region117
    $region116: #{tpu_custom_call.1} parent=1 // pred_region
      %256 = dma.done [#allocation9], 32
    $region117: #{tpu_custom_call.1} parent=1 // pred_fallthru
      _
    // Predicated region
    $region118: #{tpu_custom_call.1} parent=1 // pred_check
      _
    $region119: #{tpu_custom_call.1} parent=1 // pred_check_branch
      %258 = sbr.rel (0) target = $region121
    $region120: #{tpu_custom_call.1} parent=1 // pred_region
      %260 = dma.done [#allocation12], 32
    $region121: #{tpu_custom_call.1} parent=1 // pred_fallthru
      _
    // Predicated region
    $region122: #{tpu_custom_call.1} parent=1 // pred_check
      _
    $region123: #{tpu_custom_call.1} parent=1 // pred_check_branch
      %262 = sbr.rel (0) target = $region125
    $region124: #{tpu_custom_call.1} parent=1 // pred_region
      %264 = dma.done [#allocation12], 1024
    $region125: #{tpu_custom_call.1} parent=1 // pred_fallthru
      _
    // Predicated region
    $region126: #{tpu_custom_call.1} parent=1 // pred_check
      _
    $region127: #{tpu_custom_call.1} parent=1 // pred_check_branch
      %266 = sbr.rel (0) target = $region129
    $region128: #{tpu_custom_call.1} parent=1 // pred_region
      %268 = dma.done [#allocation15], 32
    $region129: #{tpu_custom_call.1} parent=1 // pred_fallthru
      _
    // Predicated region
    $region130: #{tpu_custom_call.1} parent=1 // pred_check
      _
    $region131: #{tpu_custom_call.1} parent=1 // pred_check_branch
      %270 = sbr.rel (0) target = $region133
    $region132: #{tpu_custom_call.1} parent=1 // pred_region
      %272 = dma.done [#allocation15], 32
    $region133: #{tpu_custom_call.1} parent=1 // pred_fallthru
      _
    // Predicated region
    $region134: #{tpu_custom_call.1} parent=1 // pred_check
      _
    $region135: #{tpu_custom_call.1} parent=1 // pred_check_branch
      %274 = sbr.rel (0) target = $region137
    $region136: #{tpu_custom_call.1} parent=1 // pred_region
      %276 = dma.done [#allocation18], 32
    $region137: #{tpu_custom_call.1} parent=1 // pred_fallthru
      _
    // Predicated region
    $region138: #{tpu_custom_call.1} parent=1 // pred_check
      _
    $region139: #{tpu_custom_call.1} parent=1 // pred_check_branch
      %278 = sbr.rel (0) target = $region141
    $region140: #{tpu_custom_call.1} parent=1 // pred_region
      %280 = dma.done [#allocation18], 1024
    $region141: #{tpu_custom_call.1} parent=1 // pred_fallthru
      _
    // Predicated region
    $region142: #{tpu_custom_call.1} parent=1 // pred_check
      _
    $region143: #{tpu_custom_call.1} parent=1 // pred_check_branch
      %282 = sbr.rel (0) target = $region145
    $region144: #{tpu_custom_call.1} parent=1 // pred_region
      %284 = dma.done [#allocation21], 32
    $region145: #{tpu_custom_call.1} parent=1 // pred_fallthru
      _
    // Predicated region
    $region146: #{tpu_custom_call.1} parent=1 // pred_check
      _
    $region147: #{tpu_custom_call.1} parent=1 // pred_check_branch
      %286 = sbr.rel (0) target = $region149
    $region148: #{tpu_custom_call.1} parent=1 // pred_region
      %288 = dma.done [#allocation21], 32
    $region149: #{tpu_custom_call.1} parent=1 // pred_fallthru
      _
    // Predicated region
    $region150: #{tpu_custom_call.1} parent=1 // pred_check
      _
    $region151: #{tpu_custom_call.1} parent=1 // pred_check_branch
      %290 = sbr.rel (0) target = $region153
    $region152: #{tpu_custom_call.1} parent=1 // pred_region
      %292 = dma.done [#allocation24], 32
    $region153: #{tpu_custom_call.1} parent=1 // pred_fallthru
      _
    %v293 = vld [vmem:[#allocation3] sm:$0xff]
    %v294 = vld [vmem:[#allocation3 + $0x8] sm:$0xff]
    %v295 = vld [vmem:[#allocation7] sm:$0x1]
    %v296 = vld [vmem:[#allocation8] sm:$0x1]
    %vm297 = vcmask 261120
    %v298 = vsel %vm297, %v293, 0.0
    %299 = vadd.xlane.f32.xlu0 %v298
    %v300 = vpop.xlane.xlu0 %299
    %v301 = vsel %vm297, %v294, 0.0
    %302 = vadd.xlane.f32.xlu0 %v301
    %v303 = vpop.xlane.xlu0 %302
    %v304 = vrcp.pop 32.0
    %v305 = vmul.f32 32.0, %v304
    %v306 = vsub.f32 1.0, %v305
    %v307 = vmul.f32 %v304, %v306
    %v308 = vadd.f32 %v304, %v307
    %vm309 = vweird.f32 %v304
    %v310 = vsel %vm309, %v304, %v308
    %v311 = vmul.f32 %v300, %v310
    %v312 = vmul.f32 %v303, %v310
    %v313 = vsub.f32 %v293, %v311
    %v314 = vsub.f32 %v294, %v312
    %v315 = vmul.f32 %v313, %v313
    %v316 = vmul.f32 %v314, %v314
    %v317 = vsel %vm297, %v315, 0.0
    %318 = vadd.xlane.f32.xlu0 %v317
    %v319 = vpop.xlane.xlu0 %318
    %v320 = vsel %vm297, %v316, 0.0
    %321 = vadd.xlane.f32.xlu0 %v320
    %v322 = vpop.xlane.xlu0 %321
    %v323 = vmul.f32 %v319, %v310
    %v324 = vmul.f32 %v322, %v310
    %v325 = vadd.f32 %v323, 1e-12
    %v326 = vadd.f32 %v324, 1e-12
    %v327 = vrsqrt.pop %v325
    %v328 = vmul.f32 %v327, %v325
    %v329 = vmul.f32 %v328, %v327
    %v330 = vmul.f32 0.5, %v329
    %v331 = vsub.f32 1.5, %v330
    %v332 = vmul.f32 %v327, %v331
    %vm333 = vweird.f32 %v325
    %vm334 = vweird.f32 %v327
    %vm335 = vmor %vm333, %vm334
    %v336 = vsel %vm335, %v327, %v332
    %v337 = vrsqrt.pop %v326
    %v338 = vmul.f32 %v337, %v326
    %v339 = vmul.f32 %v338, %v337
    %v340 = vmul.f32 0.5, %v339
    %v341 = vsub.f32 1.5, %v340
    %v342 = vmul.f32 %v337, %v341
    %vm343 = vweird.f32 %v326
    %vm344 = vweird.f32 %v337
    %vm345 = vmor %vm343, %vm344
    %v346 = vsel %vm345, %v337, %v342
    %v347 = vmul.f32 %v313, %v336
    %v348 = vmul.f32 %v314, %v346
    %v350 = vperm.slane %v295, 0
    %v352 = vmul.f32 %v347, %v350
    %v353 = vmul.f32 %v348, %v350
    %v355 = vperm.slane %v296, 0
    %v357 = vadd.f32 %v352, %v355
    %v358 = vadd.f32 %v353, %v355
    %v359 = vld [vmem:[#allocation5] sm:$0xff]
    %v360 = vld [vmem:[#allocation5 + $0x8] sm:$0xff]
    %v361 = vld [vmem:[%s4] sm:$0xff]
    %v362 = vld [vmem:[%s4 + $0x8] sm:$0xff]
    %v363 = vld [vmem:[%s4 + $0x10] sm:$0xff]
    %v364 = vld [vmem:[%s4 + $0x18] sm:$0xff]
    %v365 = vld [vmem:[%s5] sm:$0x1]
    %v367 = vperm.slane %v365, 0
    %v370 = vsel %vm297, %v357, 0
    %v373 = vsel %vm297, %v358, 0
    %375 = vmatpush.msra.mxu0 0.0
    %376 = vmatpush.msra.mxu0 0.0
    %377 = vmatpush.msra.mxu0 0.0
    %378 = vmatpush.msra.mxu0 0.0
    %379 = vmatpush.msra.mxu0 0.0
    %380 = vmatpush.msra.mxu0 0.0
    %381 = vmatpush.msra.mxu0 0.0
    %382 = vmatpush.msra.mxu0 0.0
    %383 = vmatpush.msra.mxu0 0.0
    %384 = vmatpush.msra.mxu0 0.0
    %385 = vmatpush.msra.mxu0 0.0
    %386 = vmatpush.msra.mxu0 0.0
    %387 = vmatpush.msra.mxu0 %v364
    %388 = vmatpush.msra.mxu0 %v363
    %389 = vmatpush.msra.mxu0 %v362
    %390 = vmatpush.msra.mxu0 %v361
    %391 = vmatmul.f32.gmra.mxu0 %v370
    %v392 = vpop.f32.mrf.mxu0
    %v393 = vadd.f32 %v367, %v392
    %394 = vmatmul.f32.gmra.mxu0 %v373
    %v395 = vpop.f32.mrf.mxu0
    %v396 = vadd.f32 %v367, %v395
    %397 = vdwg.mxu0
    %v398 = vld [vmem:[%s6] sm:$0xff]
    %v399 = vld [vmem:[%s6 + $0x8] sm:$0xff]
    %v400 = vld [vmem:[%s6 + $0x10] sm:$0xff]
    %v401 = vld [vmem:[%s6 + $0x18] sm:$0xff]
    %v402 = vld [vmem:[#allocation10] sm:$0x1]
    %v404 = vperm.slane %v402, 0
    %406 = vmatpush.msra.mxu0 0.0
    %407 = vmatpush.msra.mxu0 0.0
    %408 = vmatpush.msra.mxu0 0.0
    %409 = vmatpush.msra.mxu0 0.0
    %410 = vmatpush.msra.mxu0 0.0
    %411 = vmatpush.msra.mxu0 0.0
    %412 = vmatpush.msra.mxu0 0.0
    %413 = vmatpush.msra.mxu0 0.0
    %414 = vmatpush.msra.mxu0 0.0
    %415 = vmatpush.msra.mxu0 0.0
    %416 = vmatpush.msra.mxu0 0.0
    %417 = vmatpush.msra.mxu0 0.0
    %418 = vmatpush.msra.mxu0 %v401
    %419 = vmatpush.msra.mxu0 %v400
    %420 = vmatpush.msra.mxu0 %v399
    %421 = vmatpush.msra.mxu0 %v398
    %422 = vmatmul.f32.gmra.mxu0 %v370
    %v423 = vpop.f32.mrf.mxu0
    %v424 = vadd.f32 %v404, %v423
    %425 = vmatmul.f32.gmra.mxu0 %v373
    %v426 = vpop.f32.mrf.mxu0
    %v427 = vadd.f32 %v404, %v426
    %428 = vdwg.mxu0
    %v429 = vld [vmem:[%s8] sm:$0xff]
    %v430 = vld [vmem:[%s8 + $0x8] sm:$0xff]
    %v431 = vld [vmem:[%s8 + $0x10] sm:$0xff]
    %v432 = vld [vmem:[%s8 + $0x18] sm:$0xff]
    %v433 = vld [vmem:[#allocation11] sm:$0x1]
    %v435 = vperm.slane %v433, 0
    %437 = vmatpush.msra.mxu0 0.0
    %438 = vmatpush.msra.mxu0 0.0
    %439 = vmatpush.msra.mxu0 0.0
    %440 = vmatpush.msra.mxu0 0.0
    %441 = vmatpush.msra.mxu0 0.0
    %442 = vmatpush.msra.mxu0 0.0
    %443 = vmatpush.msra.mxu0 0.0
    %444 = vmatpush.msra.mxu0 0.0
    %445 = vmatpush.msra.mxu0 0.0
    %446 = vmatpush.msra.mxu0 0.0
    %447 = vmatpush.msra.mxu0 0.0
    %448 = vmatpush.msra.mxu0 0.0
    %449 = vmatpush.msra.mxu0 %v432
    %450 = vmatpush.msra.mxu0 %v431
    %451 = vmatpush.msra.mxu0 %v430
    %452 = vmatpush.msra.mxu0 %v429
    %453 = vmatmul.f32.gmra.mxu0 %v370
    %v454 = vpop.f32.mrf.mxu0
    %v455 = vadd.f32 %v435, %v454
    %456 = vmatmul.f32.gmra.mxu0 %v373
    %v457 = vpop.f32.mrf.mxu0
    %v458 = vadd.f32 %v435, %v457
    %459 = vdwg.mxu0
    %vm460 = vcmask 64512
    %v462 = vsel %vm460, %v393, 0
    %v465 = vsel %vm460, %v396, 0
    %v468 = vsel %vm460, %v424, 0
    %v471 = vsel %vm460, %v427, 0
    %473 = vmatpush.xpose.msra.mxu0 0.0
    %474 = vmatpush.xpose.msra.mxu0 0.0
    %475 = vmatpush.xpose.msra.mxu0 0.0
    %476 = vmatpush.xpose.msra.mxu0 0.0
    %477 = vmatpush.xpose.msra.mxu0 0.0
    %478 = vmatpush.xpose.msra.mxu0 0.0
    %479 = vmatpush.xpose.msra.mxu0 0.0
    %480 = vmatpush.xpose.msra.mxu0 0.0
    %481 = vmatpush.xpose.msra.mxu0 0.0
    %482 = vmatpush.xpose.msra.mxu0 0.0
    %483 = vmatpush.xpose.msra.mxu0 0.0
    %484 = vmatpush.xpose.msra.mxu0 0.0
    %485 = vmatpush.xpose.msra.mxu0 0.0
    %486 = vmatpush.xpose.msra.mxu0 0.0
    %487 = vmatpush.xpose.msra.mxu0 %v471
    %488 = vmatpush.xpose.msra.mxu0 %v468
    %489 = vmatmul.f32.gmra.mxu0 %v462
    %v490 = vpop.f32.mrf.mxu0
    %v491 = vadd.f32 0.0, %v490
    %492 = vmatmul.f32.gmra.mxu0 %v465
    %v493 = vpop.f32.mrf.mxu0
    %v494 = vadd.f32 0.0, %v493
    %495 = vdwg.mxu0
    %v496 = vmul.f32 %v491, 0.35355338
    %v497 = vmul.f32 %v494, 0.35355338
    %v498 = vadd.f32 %v496, %v359
    %v499 = vadd.f32 %v497, %v360
    %vm500 = vcmask 130048
    %v501 = vsel %vm500, %v498, -inf
    %502 = vmax.xlane.f32.xlu0 %v501
    %v503 = vpop.xlane.xlu0 %502
    %v504 = vsel %vm500, %v499, -inf
    %505 = vmax.xlane.f32.xlu0 %v504
    %v506 = vpop.xlane.xlu0 %505
    %v507 = vsub.f32 %v498, %v503
    %v508 = vsub.f32 %v499, %v506
    %v509 = vmul.f32 %v507, 1.442695
    %v510 = vpow.pop %v509
    %v511 = vmul.f32 %v508, 1.442695
    %v512 = vpow.pop %v511
    %v513 = vsel %vm500, %v510, 0.0
    %514 = vadd.xlane.f32.xlu0 %v513
    %v515 = vpop.xlane.xlu0 %514
    %v516 = vsel %vm500, %v512, 0.0
    %517 = vadd.xlane.f32.xlu0 %v516
    %v518 = vpop.xlane.xlu0 %517
    %v519 = vrcp.pop %v515
    %v520 = vrcp.pop %v518
    %v521 = vmul.f32 %v510, %v519
    %v522 = vmul.f32 %v512, %v520
    %v524 = vsel %vm500, %v521, 0
    %v527 = vsel %vm500, %v522, 0
    %529 = vmatpush.msra.mxu0 0.0
    %530 = vmatpush.msra.mxu0 0.0
    %531 = vmatpush.msra.mxu0 0.0
    %532 = vmatpush.msra.mxu0 0.0
    %533 = vmatpush.msra.mxu0 0.0
    %534 = vmatpush.msra.mxu0 0.0
    %535 = vmatpush.msra.mxu0 0.0
    %536 = vmatpush.msra.mxu0 0.0
    %537 = vmatpush.msra.mxu0 0.0
    %538 = vmatpush.msra.mxu0 0.0
    %539 = vmatpush.msra.mxu0 0.0
    %540 = vmatpush.msra.mxu0 0.0
    %541 = vmatpush.msra.mxu0 0.0
    %542 = vmatpush.msra.mxu0 0.0
    %543 = vmatpush.msra.mxu0 %v458
    %544 = vmatpush.msra.mxu0 %v455
    %545 = vmatmul.f32.gmra.mxu0 %v524
    %v546 = vpop.f32.mrf.mxu0
    %v547 = vadd.f32 0.0, %v546
    %548 = vmatmul.f32.gmra.mxu0 %v527
    %v549 = vpop.f32.mrf.mxu0
    %v550 = vadd.f32 0.0, %v549
    %551 = vdwg.mxu0
    %552 = vrot.lane.b32.xlu0 %v393, 120
    %v553 = vpop.permute.xlu0 %552
    %554 = vrot.lane.b32.xlu0 %v396, 120
    %v555 = vpop.permute.xlu0 %554
    %556 = vrot.lane.b32.xlu0 %v424, 120
    %v557 = vpop.permute.xlu0 %556
    %558 = vrot.lane.b32.xlu0 %v427, 120
    %v559 = vpop.permute.xlu0 %558
    %v560 = vsel %vm460, %v553, 0
    %v562 = vsel %vm460, %v555, 0
    %v564 = vsel %vm460, %v557, 0
    %v566 = vsel %vm460, %v559, 0
    %568 = vmatpush.xpose.msra.mxu0 0.0
    %569 = vmatpush.xpose.msra.mxu0 0.0
    %570 = vmatpush.xpose.msra.mxu0 0.0
    %571 = vmatpush.xpose.msra.mxu0 0.0
    %572 = vmatpush.xpose.msra.mxu0 0.0
    %573 = vmatpush.xpose.msra.mxu0 0.0
    %574 = vmatpush.xpose.msra.mxu0 0.0
    %575 = vmatpush.xpose.msra.mxu0 0.0
    %576 = vmatpush.xpose.msra.mxu0 0.0
    %577 = vmatpush.xpose.msra.mxu0 0.0
    %578 = vmatpush.xpose.msra.mxu0 0.0
    %579 = vmatpush.xpose.msra.mxu0 0.0
    %580 = vmatpush.xpose.msra.mxu0 0.0
    %581 = vmatpush.xpose.msra.mxu0 0.0
    %582 = vmatpush.xpose.msra.mxu0 %v566
    %583 = vmatpush.xpose.msra.mxu0 %v564
    %584 = vmatmul.f32.gmra.mxu0 %v560
    %v585 = vpop.f32.mrf.mxu0
    %v586 = vadd.f32 0.0, %v585
    %587 = vmatmul.f32.gmra.mxu0 %v562
    %v588 = vpop.f32.mrf.mxu0
    %v589 = vadd.f32 0.0, %v588
    %590 = vdwg.mxu0
    %v591 = vmul.f32 %v586, 0.35355338
    %v592 = vmul.f32 %v589, 0.35355338
    %v593 = vadd.f32 %v591, %v359
    %v594 = vadd.f32 %v592, %v360
    %v595 = vsel %vm500, %v593, -inf
    %596 = vmax.xlane.f32.xlu0 %v595
    %v597 = vpop.xlane.xlu0 %596
    %v598 = vsel %vm500, %v594, -inf
    %599 = vmax.xlane.f32.xlu0 %v598
    %v600 = vpop.xlane.xlu0 %599
    %v601 = vsub.f32 %v593, %v597
    %v602 = vsub.f32 %v594, %v600
    %v603 = vmul.f32 %v601, 1.442695
    %v604 = vpow.pop %v603
    %v605 = vmul.f32 %v602, 1.442695
    %v606 = vpow.pop %v605
    %v607 = vsel %vm500, %v604, 0.0
    %608 = vadd.xlane.f32.xlu0 %v607
    %v609 = vpop.xlane.xlu0 %608
    %v610 = vsel %vm500, %v606, 0.0
    %611 = vadd.xlane.f32.xlu0 %v610
    %v612 = vpop.xlane.xlu0 %611
    %v613 = vrcp.pop %v609
    %v614 = vrcp.pop %v612
    %v615 = vmul.f32 %v604, %v613
    %v616 = vmul.f32 %v606, %v614
    %619 = vrot.lane.b32.xlu0 %v455, 120
    %v620 = vpop.permute.xlu0 %619
    %621 = vrot.lane.b32.xlu0 %v458, 120
    %v622 = vpop.permute.xlu0 %621
    %v626 = vsel %vm500, %v615, 0
    %v629 = vsel %vm500, %v616, 0
    %631 = vmatpush.msra.mxu0 0.0
    %632 = vmatpush.msra.mxu0 0.0
    %633 = vmatpush.msra.mxu0 0.0
    %634 = vmatpush.msra.mxu0 0.0
    %635 = vmatpush.msra.mxu0 0.0
    %636 = vmatpush.msra.mxu0 0.0
    %637 = vmatpush.msra.mxu0 0.0
    %638 = vmatpush.msra.mxu0 0.0
    %639 = vmatpush.msra.mxu0 0.0
    %640 = vmatpush.msra.mxu0 0.0
    %641 = vmatpush.msra.mxu0 0.0
    %642 = vmatpush.msra.mxu0 0.0
    %643 = vmatpush.msra.mxu0 0.0
    %644 = vmatpush.msra.mxu0 0.0
    %645 = vmatpush.msra.mxu0 %v622
    %646 = vmatpush.msra.mxu0 %v620
    %647 = vmatmul.f32.gmra.mxu0 %v626
    %v648 = vpop.f32.mrf.mxu0
    %v649 = vadd.f32 0.0, %v648
    %650 = vmatmul.f32.gmra.mxu0 %v629
    %v651 = vpop.f32.mrf.mxu0
    %v652 = vadd.f32 0.0, %v651
    %653 = vdwg.mxu0
    %654 = vrot.lane.b32.xlu0 %v393, 112
    %v655 = vpop.permute.xlu0 %654
    %656 = vrot.lane.b32.xlu0 %v396, 112
    %v657 = vpop.permute.xlu0 %656
    %658 = vrot.lane.b32.xlu0 %v424, 112
    %v659 = vpop.permute.xlu0 %658
    %660 = vrot.lane.b32.xlu0 %v427, 112
    %v661 = vpop.permute.xlu0 %660
    %v662 = vsel %vm460, %v655, 0
    %v664 = vsel %vm460, %v657, 0
    %v666 = vsel %vm460, %v659, 0
    %v668 = vsel %vm460, %v661, 0
    %670 = vmatpush.xpose.msra.mxu0 0.0
    %671 = vmatpush.xpose.msra.mxu0 0.0
    %672 = vmatpush.xpose.msra.mxu0 0.0
    %673 = vmatpush.xpose.msra.mxu0 0.0
    %674 = vmatpush.xpose.msra.mxu0 0.0
    %675 = vmatpush.xpose.msra.mxu0 0.0
    %676 = vmatpush.xpose.msra.mxu0 0.0
    %677 = vmatpush.xpose.msra.mxu0 0.0
    %678 = vmatpush.xpose.msra.mxu0 0.0
    %679 = vmatpush.xpose.msra.mxu0 0.0
    %680 = vmatpush.xpose.msra.mxu0 0.0
    %681 = vmatpush.xpose.msra.mxu0 0.0
    %682 = vmatpush.xpose.msra.mxu0 0.0
    %683 = vmatpush.xpose.msra.mxu0 0.0
    %684 = vmatpush.xpose.msra.mxu0 %v668
    %685 = vmatpush.xpose.msra.mxu0 %v666
    %686 = vmatmul.f32.gmra.mxu0 %v662
    %v687 = vpop.f32.mrf.mxu0
    %v688 = vadd.f32 0.0, %v687
    %689 = vmatmul.f32.gmra.mxu0 %v664
    %v690 = vpop.f32.mrf.mxu0
    %v691 = vadd.f32 0.0, %v690
    %692 = vdwg.mxu0
    %v693 = vmul.f32 %v688, 0.35355338
    %v694 = vmul.f32 %v691, 0.35355338
    %v695 = vadd.f32 %v693, %v359
    %v696 = vadd.f32 %v694, %v360
    %v697 = vsel %vm500, %v695, -inf
    %698 = vmax.xlane.f32.xlu0 %v697
    %v699 = vpop.xlane.xlu0 %698
    %v700 = vsel %vm500, %v696, -inf
    %701 = vmax.xlane.f32.xlu0 %v700
    %v702 = vpop.xlane.xlu0 %701
    %v703 = vsub.f32 %v695, %v699
    %v704 = vsub.f32 %v696, %v702
    %v705 = vmul.f32 %v703, 1.442695
    %v706 = vpow.pop %v705
    %v707 = vmul.f32 %v704, 1.442695
    %v708 = vpow.pop %v707
    %v709 = vsel %vm500, %v706, 0.0
    %710 = vadd.xlane.f32.xlu0 %v709
    %v711 = vpop.xlane.xlu0 %710
    %v712 = vsel %vm500, %v708, 0.0
    %713 = vadd.xlane.f32.xlu0 %v712
    %v714 = vpop.xlane.xlu0 %713
    %v715 = vrcp.pop %v711
    %v716 = vrcp.pop %v714
    %v717 = vmul.f32 %v706, %v715
    %v718 = vmul.f32 %v708, %v716
    %719 = vrot.lane.b32.xlu0 %v455, 112
    %v720 = vpop.permute.xlu0 %719
    %721 = vrot.lane.b32.xlu0 %v458, 112
    %v722 = vpop.permute.xlu0 %721
    %v726 = vsel %vm500, %v717, 0
    %v729 = vsel %vm500, %v718, 0
    %731 = vmatpush.msra.mxu0 0.0
    %732 = vmatpush.msra.mxu0 0.0
    %733 = vmatpush.msra.mxu0 0.0
    %734 = vmatpush.msra.mxu0 0.0
    %735 = vmatpush.msra.mxu0 0.0
    %736 = vmatpush.msra.mxu0 0.0
    %737 = vmatpush.msra.mxu0 0.0
    %738 = vmatpush.msra.mxu0 0.0
    %739 = vmatpush.msra.mxu0 0.0
    %740 = vmatpush.msra.mxu0 0.0
    %741 = vmatpush.msra.mxu0 0.0
    %742 = vmatpush.msra.mxu0 0.0
    %743 = vmatpush.msra.mxu0 0.0
    %744 = vmatpush.msra.mxu0 0.0
    %745 = vmatpush.msra.mxu0 %v722
    %746 = vmatpush.msra.mxu0 %v720
    %747 = vmatmul.f32.gmra.mxu0 %v726
    %v748 = vpop.f32.mrf.mxu0
    %v749 = vadd.f32 0.0, %v748
    %750 = vmatmul.f32.gmra.mxu0 %v729
    %v751 = vpop.f32.mrf.mxu0
    %v752 = vadd.f32 0.0, %v751
    %753 = vdwg.mxu0
    %754 = vrot.lane.b32.xlu0 %v393, 104
    %v755 = vpop.permute.xlu0 %754
    %756 = vrot.lane.b32.xlu0 %v396, 104
    %v757 = vpop.permute.xlu0 %756
    %758 = vrot.lane.b32.xlu0 %v424, 104
    %v759 = vpop.permute.xlu0 %758
    %760 = vrot.lane.b32.xlu0 %v427, 104
    %v761 = vpop.permute.xlu0 %760
    %v762 = vsel %vm460, %v755, 0
    %v764 = vsel %vm460, %v757, 0
    %v766 = vsel %vm460, %v759, 0
    %v768 = vsel %vm460, %v761, 0
    %770 = vmatpush.xpose.msra.mxu0 0.0
    %771 = vmatpush.xpose.msra.mxu0 0.0
    %772 = vmatpush.xpose.msra.mxu0 0.0
    %773 = vmatpush.xpose.msra.mxu0 0.0
    %774 = vmatpush.xpose.msra.mxu0 0.0
    %775 = vmatpush.xpose.msra.mxu0 0.0
    %776 = vmatpush.xpose.msra.mxu0 0.0
    %777 = vmatpush.xpose.msra.mxu0 0.0
    %778 = vmatpush.xpose.msra.mxu0 0.0
    %779 = vmatpush.xpose.msra.mxu0 0.0
    %780 = vmatpush.xpose.msra.mxu0 0.0
    %781 = vmatpush.xpose.msra.mxu0 0.0
    %782 = vmatpush.xpose.msra.mxu0 0.0
    %783 = vmatpush.xpose.msra.mxu0 0.0
    %784 = vmatpush.xpose.msra.mxu0 %v768
    %785 = vmatpush.xpose.msra.mxu0 %v766
    %786 = vmatmul.f32.gmra.mxu0 %v762
    %v787 = vpop.f32.mrf.mxu0
    %v788 = vadd.f32 0.0, %v787
    %789 = vmatmul.f32.gmra.mxu0 %v764
    %v790 = vpop.f32.mrf.mxu0
    %v791 = vadd.f32 0.0, %v790
    %792 = vdwg.mxu0
    %v793 = vmul.f32 %v788, 0.35355338
    %v794 = vmul.f32 %v791, 0.35355338
    %v795 = vadd.f32 %v793, %v359
    %v796 = vadd.f32 %v794, %v360
    %v797 = vsel %vm500, %v795, -inf
    %798 = vmax.xlane.f32.xlu0 %v797
    %v799 = vpop.xlane.xlu0 %798
    %v800 = vsel %vm500, %v796, -inf
    %801 = vmax.xlane.f32.xlu0 %v800
    %v802 = vpop.xlane.xlu0 %801
    %v803 = vsub.f32 %v795, %v799
    %v804 = vsub.f32 %v796, %v802
    %v805 = vmul.f32 %v803, 1.442695
    %v806 = vpow.pop %v805
    %v807 = vmul.f32 %v804, 1.442695
    %v808 = vpow.pop %v807
    %v809 = vsel %vm500, %v806, 0.0
    %810 = vadd.xlane.f32.xlu0 %v809
    %v811 = vpop.xlane.xlu0 %810
    %v812 = vsel %vm500, %v808, 0.0
    %813 = vadd.xlane.f32.xlu0 %v812
    %v814 = vpop.xlane.xlu0 %813
    %v815 = vrcp.pop %v811
    %v816 = vrcp.pop %v814
    %v817 = vmul.f32 %v806, %v815
    %v818 = vmul.f32 %v808, %v816
    %819 = vrot.lane.b32.xlu0 %v455, 104
    %v820 = vpop.permute.xlu0 %819
    %821 = vrot.lane.b32.xlu0 %v458, 104
    %v822 = vpop.permute.xlu0 %821
    %v826 = vsel %vm500, %v817, 0
    %v829 = vsel %vm500, %v818, 0
    %831 = vmatpush.msra.mxu0 0.0
    %832 = vmatpush.msra.mxu0 0.0
    %833 = vmatpush.msra.mxu0 0.0
    %834 = vmatpush.msra.mxu0 0.0
    %835 = vmatpush.msra.mxu0 0.0
    %836 = vmatpush.msra.mxu0 0.0
    %837 = vmatpush.msra.mxu0 0.0
    %838 = vmatpush.msra.mxu0 0.0
    %839 = vmatpush.msra.mxu0 0.0
    %840 = vmatpush.msra.mxu0 0.0
    %841 = vmatpush.msra.mxu0 0.0
    %842 = vmatpush.msra.mxu0 0.0
    %843 = vmatpush.msra.mxu0 0.0
    %844 = vmatpush.msra.mxu0 0.0
    %845 = vmatpush.msra.mxu0 %v822
    %846 = vmatpush.msra.mxu0 %v820
    %847 = vmatmul.f32.gmra.mxu0 %v826
    %v848 = vpop.f32.mrf.mxu0
    %v849 = vadd.f32 0.0, %v848
    %850 = vmatmul.f32.gmra.mxu0 %v829
    %v851 = vpop.f32.mrf.mxu0
    %v852 = vadd.f32 0.0, %v851
    %853 = vdwg.mxu0
    %856 = vrot.lane.b32.xlu0 %v649, 8
    %v857 = vpop.permute.xlu0 %856
    %858 = vrot.lane.b32.xlu0 %v652, 8
    %v859 = vpop.permute.xlu0 %858
    %864 = vrot.lane.b32.xlu0 %v749, 16
    %v865 = vpop.permute.xlu0 %864
    %866 = vrot.lane.b32.xlu0 %v752, 16
    %v867 = vpop.permute.xlu0 %866
    %872 = vrot.lane.b32.xlu0 %v849, 24
    %v873 = vpop.permute.xlu0 %872
    %874 = vrot.lane.b32.xlu0 %v852, 24
    %v875 = vpop.permute.xlu0 %874
    %v878 = vsel %vm460, %v547, %v857
    %v879 = vsel %vm460, %v550, %v859
    %v880 = vsel %vm500, %v878, %v865
    %v881 = vsel %vm500, %v879, %v867
    %vm882 = vcmask 195584
    %v883 = vsel %vm882, %v880, %v873
    %v884 = vsel %vm882, %v881, %v875
    %v885 = vld [vmem:[#allocation13] sm:$0xff]
    %v886 = vld [vmem:[#allocation13 + $0x8] sm:$0xff]
    %v887 = vld [vmem:[#allocation13 + $0x10] sm:$0xff]
    %v888 = vld [vmem:[#allocation13 + $0x18] sm:$0xff]
    %v889 = vld [vmem:[#allocation14] sm:$0x1]
    %v891 = vperm.slane %v889, 0
    %v894 = vsel %vm297, %v883, 0
    %v897 = vsel %vm297, %v884, 0
    %899 = vmatpush.msra.mxu0 0.0
    %900 = vmatpush.msra.mxu0 0.0
    %901 = vmatpush.msra.mxu0 0.0
    %902 = vmatpush.msra.mxu0 0.0
    %903 = vmatpush.msra.mxu0 0.0
    %904 = vmatpush.msra.mxu0 0.0
    %905 = vmatpush.msra.mxu0 0.0
    %906 = vmatpush.msra.mxu0 0.0
    %907 = vmatpush.msra.mxu0 0.0
    %908 = vmatpush.msra.mxu0 0.0
    %909 = vmatpush.msra.mxu0 0.0
    %910 = vmatpush.msra.mxu0 0.0
    %911 = vmatpush.msra.mxu0 %v888
    %912 = vmatpush.msra.mxu0 %v887
    %913 = vmatpush.msra.mxu0 %v886
    %914 = vmatpush.msra.mxu0 %v885
    %915 = vmatmul.f32.gmra.mxu0 %v894
    %v916 = vpop.f32.mrf.mxu0
    %v917 = vadd.f32 %v891, %v916
    %918 = vmatmul.f32.gmra.mxu0 %v897
    %v919 = vpop.f32.mrf.mxu0
    %v920 = vadd.f32 %v891, %v919
    %921 = vdwg.mxu0
    %v922 = vadd.f32 %v357, %v917
    %v923 = vadd.f32 %v358, %v920
    %v924 = vld [vmem:[#allocation16] sm:$0x1]
    %v925 = vld [vmem:[#allocation17] sm:$0x1]
    %v926 = vsel %vm297, %v922, 0.0
    %927 = vadd.xlane.f32.xlu0 %v926
    %v928 = vpop.xlane.xlu0 %927
    %v929 = vsel %vm297, %v923, 0.0
    %930 = vadd.xlane.f32.xlu0 %v929
    %v931 = vpop.xlane.xlu0 %930
    %v932 = vmul.f32 %v928, %v310
    %v933 = vmul.f32 %v931, %v310
    %v934 = vsub.f32 %v922, %v932
    %v935 = vsub.f32 %v923, %v933
    %v936 = vmul.f32 %v934, %v934
    %v937 = vmul.f32 %v935, %v935
    %v938 = vsel %vm297, %v936, 0.0
    %939 = vadd.xlane.f32.xlu0 %v938
    %v940 = vpop.xlane.xlu0 %939
    %v941 = vsel %vm297, %v937, 0.0
    %942 = vadd.xlane.f32.xlu0 %v941
    %v943 = vpop.xlane.xlu0 %942
    %v944 = vmul.f32 %v940, %v310
    %v945 = vmul.f32 %v943, %v310
    %v946 = vadd.f32 %v944, 1e-12
    %v947 = vadd.f32 %v945, 1e-12
    %v948 = vrsqrt.pop %v946
    %v949 = vmul.f32 %v948, %v946
    %v950 = vmul.f32 %v949, %v948
    %v951 = vmul.f32 0.5, %v950
    %v952 = vsub.f32 1.5, %v951
    %v953 = vmul.f32 %v948, %v952
    %vm954 = vweird.f32 %v946
    %vm955 = vweird.f32 %v948
    %vm956 = vmor %vm954, %vm955
    %v957 = vsel %vm956, %v948, %v953
    %v958 = vrsqrt.pop %v947
    %v959 = vmul.f32 %v958, %v947
    %v960 = vmul.f32 %v959, %v958
    %v961 = vmul.f32 0.5, %v960
    %v962 = vsub.f32 1.5, %v961
    %v963 = vmul.f32 %v958, %v962
    %vm964 = vweird.f32 %v947
    %vm965 = vweird.f32 %v958
    %vm966 = vmor %vm964, %vm965
    %v967 = vsel %vm966, %v958, %v963
    %v968 = vmul.f32 %v934, %v957
    %v969 = vmul.f32 %v935, %v967
    %v971 = vperm.slane %v924, 0
    %v973 = vmul.f32 %v968, %v971
    %v974 = vmul.f32 %v969, %v971
    %v976 = vperm.slane %v925, 0
    %v978 = vadd.f32 %v973, %v976
    %v979 = vadd.f32 %v974, %v976
    %v980 = vld [vmem:[#allocation19] sm:$0xff]
    %v981 = vld [vmem:[#allocation19 + $0x8] sm:$0xff]
    %v982 = vld [vmem:[#allocation19 + $0x10] sm:$0xff]
    %v983 = vld [vmem:[#allocation19 + $0x18] sm:$0xff]
    %v984 = vld [vmem:[#allocation20] sm:$0x1]
    %v986 = vperm.slane %v984, 0
    %v989 = vsel %vm297, %v978, 0
    %v992 = vsel %vm297, %v979, 0
    %994 = vmatpush.msra.mxu0 0.0
    %995 = vmatpush.msra.mxu0 0.0
    %996 = vmatpush.msra.mxu0 0.0
    %997 = vmatpush.msra.mxu0 0.0
    %998 = vmatpush.msra.mxu0 0.0
    %999 = vmatpush.msra.mxu0 0.0
    %1000 = vmatpush.msra.mxu0 0.0
    %1001 = vmatpush.msra.mxu0 0.0
    %1002 = vmatpush.msra.mxu0 0.0
    %1003 = vmatpush.msra.mxu0 0.0
    %1004 = vmatpush.msra.mxu0 0.0
    %1005 = vmatpush.msra.mxu0 0.0
    %1006 = vmatpush.msra.mxu0 %v983
    %1007 = vmatpush.msra.mxu0 %v982
    %1008 = vmatpush.msra.mxu0 %v981
    %1009 = vmatpush.msra.mxu0 %v980
    %1010 = vmatmul.f32.gmra.mxu0 %v989
    %v1011 = vpop.f32.mrf.mxu0
    %v1012 = vadd.f32 %v986, %v1011
    %1013 = vmatmul.f32.gmra.mxu0 %v992
    %v1014 = vpop.f32.mrf.mxu0
    %v1015 = vadd.f32 %v986, %v1014
    %1016 = vdwg.mxu0
    %v1017 = vmul.f32 %v1012, 0.5
    %v1018 = vmul.f32 %v1015, 0.5
    %v1019 = vmul.f32 %v1012, 0.044715
    %v1020 = vmul.f32 %v1015, 0.044715
    %v1021 = vmul.f32 %v1019, %v1012
    %v1022 = vmul.f32 %v1020, %v1015
    %v1023 = vmul.f32 %v1021, %v1012
    %v1024 = vmul.f32 %v1022, %v1015
    %v1025 = vadd.f32 %v1012, %v1023
    %v1026 = vadd.f32 %v1015, %v1024
    %v1027 = vmul.f32 %v1025, 0.7978846
    %v1028 = vmul.f32 %v1026, 0.7978846
    %v1029 = vtanh.pop %v1027
    %v1030 = vtanh.pop %v1028
    %v1031 = vadd.f32 %v1029, 1.0
    %v1032 = vadd.f32 %v1030, 1.0
    %v1033 = vmul.f32 %v1017, %v1031
    %v1034 = vmul.f32 %v1018, %v1032
    %v1035 = vld [vmem:[%s16] sm:$0xff]
    %v1036 = vld [vmem:[%s16 + $0x8] sm:$0xff]
    %v1037 = vld [vmem:[%s16 + $0x10] sm:$0xff]
    %v1038 = vld [vmem:[%s16 + $0x18] sm:$0xff]
    %v1039 = vld [vmem:[%s16 + $0x20] sm:$0xff]
    %v1040 = vld [vmem:[%s16 + $0x28] sm:$0xff]
    %v1041 = vld [vmem:[%s16 + $0x30] sm:$0xff]
    %v1042 = vld [vmem:[%s16 + $0x38] sm:$0xff]
    %v1043 = vld [vmem:[#allocation22] sm:$0x1]
    %v1045 = vperm.slane %v1043, 0
    %vm1047 = vcmask 523264
    %v1049 = vsel %vm1047, %v1033, 0
    %v1052 = vsel %vm1047, %v1034, 0
    %1054 = vmatpush.msra.mxu0 0.0
    %1055 = vmatpush.msra.mxu0 0.0
    %1056 = vmatpush.msra.mxu0 0.0
    %1057 = vmatpush.msra.mxu0 0.0
    %1058 = vmatpush.msra.mxu0 0.0
    %1059 = vmatpush.msra.mxu0 0.0
    %1060 = vmatpush.msra.mxu0 0.0
    %1061 = vmatpush.msra.mxu0 0.0
    %1062 = vmatpush.msra.mxu0 %v1042
    %1063 = vmatpush.msra.mxu0 %v1041
    %1064 = vmatpush.msra.mxu0 %v1040
    %1065 = vmatpush.msra.mxu0 %v1039
    %1066 = vmatpush.msra.mxu0 %v1038
    %1067 = vmatpush.msra.mxu0 %v1037
    %1068 = vmatpush.msra.mxu0 %v1036
    %1069 = vmatpush.msra.mxu0 %v1035
    %1070 = vmatmul.f32.gmra.mxu0 %v1049
    %v1071 = vpop.f32.mrf.mxu0
    %v1072 = vadd.f32 %v1045, %v1071
    %1073 = vmatmul.f32.gmra.mxu0 %v1052
    %v1074 = vpop.f32.mrf.mxu0
    %v1075 = vadd.f32 %v1045, %v1074
    %1076 = vdwg.mxu0
    %v1077 = vadd.f32 %v978, %v1072
    %v1078 = vadd.f32 %v979, %v1075
    %v1079 = vld [vmem:[#allocation23] sm:$0x1]
    %v1080 = vld [vmem:[%s19] sm:$0x1]
    %v1081 = vsel %vm297, %v1077, 0.0
    %1082 = vadd.xlane.f32.xlu0 %v1081
    %v1083 = vpop.xlane.xlu0 %1082
    %v1084 = vsel %vm297, %v1078, 0.0
    %1085 = vadd.xlane.f32.xlu0 %v1084
    %v1086 = vpop.xlane.xlu0 %1085
    %v1087 = vmul.f32 %v1083, %v310
    %v1088 = vmul.f32 %v1086, %v310
    %v1089 = vsub.f32 %v1077, %v1087
    %v1090 = vsub.f32 %v1078, %v1088
    %v1091 = vmul.f32 %v1089, %v1089
    %v1092 = vmul.f32 %v1090, %v1090
    %v1093 = vsel %vm297, %v1091, 0.0
    %1094 = vadd.xlane.f32.xlu0 %v1093
    %v1095 = vpop.xlane.xlu0 %1094
    %v1096 = vsel %vm297, %v1092, 0.0
    %1097 = vadd.xlane.f32.xlu0 %v1096
    %v1098 = vpop.xlane.xlu0 %1097
    %v1099 = vmul.f32 %v1095, %v310
    %v1100 = vmul.f32 %v1098, %v310
    %v1101 = vadd.f32 %v1099, 1e-12
    %v1102 = vadd.f32 %v1100, 1e-12
    %v1103 = vrsqrt.pop %v1101
    %v1104 = vmul.f32 %v1103, %v1101
    %v1105 = vmul.f32 %v1104, %v1103
    %v1106 = vmul.f32 0.5, %v1105
    %v1107 = vsub.f32 1.5, %v1106
    %v1108 = vmul.f32 %v1103, %v1107
    %vm1109 = vweird.f32 %v1101
    %vm1110 = vweird.f32 %v1103
    %vm1111 = vmor %vm1109, %vm1110
    %v1112 = vsel %vm1111, %v1103, %v1108
    %v1113 = vrsqrt.pop %v1102
    %v1114 = vmul.f32 %v1113, %v1102
    %v1115 = vmul.f32 %v1114, %v1113
    %v1116 = vmul.f32 0.5, %v1115
    %v1117 = vsub.f32 1.5, %v1116
    %v1118 = vmul.f32 %v1113, %v1117
    %vm1119 = vweird.f32 %v1102
    %vm1120 = vweird.f32 %v1113
    %vm1121 = vmor %vm1119, %vm1120
    %v1122 = vsel %vm1121, %v1113, %v1118
    %v1123 = vmul.f32 %v1089, %v1112
    %v1124 = vmul.f32 %v1090, %v1122
    %v1126 = vperm.slane %v1079, 0
    %v1128 = vmul.f32 %v1123, %v1126
    %v1129 = vmul.f32 %v1124, %v1126
    %v1131 = vperm.slane %v1080, 0
    %v1133 = vadd.f32 %v1128, %v1131
    %v1134 = vadd.f32 %v1129, %v1131
    %s1135 = scalar_lea.vmem %s4, 32
    %v1136 = vld [vmem:[%s1135] sm:$0xff]
    %v1137 = vld [vmem:[%s1135 + $0x8] sm:$0xff]
    %v1138 = vld [vmem:[%s1135 + $0x10] sm:$0xff]
    %v1139 = vld [vmem:[%s1135 + $0x18] sm:$0xff]
    %s1140 = scalar_lea.vmem %s5, 1
    %v1141 = vld [vmem:[%s1140] sm:$0x1]
    %v1143 = vperm.slane %v1141, 0
    %v1146 = vsel %vm297, %v1133, 0
    %v1149 = vsel %vm297, %v1134, 0
    %1151 = vmatpush.msra.mxu0 0.0
    %1152 = vmatpush.msra.mxu0 0.0
    %1153 = vmatpush.msra.mxu0 0.0
    %1154 = vmatpush.msra.mxu0 0.0
    %1155 = vmatpush.msra.mxu0 0.0
    %1156 = vmatpush.msra.mxu0 0.0
    %1157 = vmatpush.msra.mxu0 0.0
    %1158 = vmatpush.msra.mxu0 0.0
    %1159 = vmatpush.msra.mxu0 0.0
    %1160 = vmatpush.msra.mxu0 0.0
    %1161 = vmatpush.msra.mxu0 0.0
    %1162 = vmatpush.msra.mxu0 0.0
    %1163 = vmatpush.msra.mxu0 %v1139
    %1164 = vmatpush.msra.mxu0 %v1138
    %1165 = vmatpush.msra.mxu0 %v1137
    %1166 = vmatpush.msra.mxu0 %v1136
    %1167 = vmatmul.f32.gmra.mxu0 %v1146
    %v1168 = vpop.f32.mrf.mxu0
    %v1169 = vadd.f32 %v1143, %v1168
    %1170 = vmatmul.f32.gmra.mxu0 %v1149
    %v1171 = vpop.f32.mrf.mxu0
    %v1172 = vadd.f32 %v1143, %v1171
    %1173 = vdwg.mxu0
    %s1174 = scalar_lea.vmem %s6, 32
    %v1175 = vld [vmem:[%s1174] sm:$0xff]
    %v1176 = vld [vmem:[%s1174 + $0x8] sm:$0xff]
    %v1177 = vld [vmem:[%s1174 + $0x10] sm:$0xff]
    %v1178 = vld [vmem:[%s1174 + $0x18] sm:$0xff]
    %s1179 = scalar_lea.vmem [#allocation10], 1
    %v1180 = vld [vmem:[%s1179] sm:$0x1]
    %v1182 = vperm.slane %v1180, 0
    %1184 = vmatpush.msra.mxu0 0.0
    %1185 = vmatpush.msra.mxu0 0.0
    %1186 = vmatpush.msra.mxu0 0.0
    %1187 = vmatpush.msra.mxu0 0.0
    %1188 = vmatpush.msra.mxu0 0.0
    %1189 = vmatpush.msra.mxu0 0.0
    %1190 = vmatpush.msra.mxu0 0.0
    %1191 = vmatpush.msra.mxu0 0.0
    %1192 = vmatpush.msra.mxu0 0.0
    %1193 = vmatpush.msra.mxu0 0.0
    %1194 = vmatpush.msra.mxu0 0.0
    %1195 = vmatpush.msra.mxu0 0.0
    %1196 = vmatpush.msra.mxu0 %v1178
    %1197 = vmatpush.msra.mxu0 %v1177
    %1198 = vmatpush.msra.mxu0 %v1176
    %1199 = vmatpush.msra.mxu0 %v1175
    %1200 = vmatmul.f32.gmra.mxu0 %v1146
    %v1201 = vpop.f32.mrf.mxu0
    %v1202 = vadd.f32 %v1182, %v1201
    %1203 = vmatmul.f32.gmra.mxu0 %v1149
    %v1204 = vpop.f32.mrf.mxu0
    %v1205 = vadd.f32 %v1182, %v1204
    %1206 = vdwg.mxu0
    %s1207 = scalar_lea.vmem %s8, 32
    %v1208 = vld [vmem:[%s1207] sm:$0xff]
    %v1209 = vld [vmem:[%s1207 + $0x8] sm:$0xff]
    %v1210 = vld [vmem:[%s1207 + $0x10] sm:$0xff]
    %v1211 = vld [vmem:[%s1207 + $0x18] sm:$0xff]
    %s1212 = scalar_lea.vmem [#allocation11], 1
    %v1213 = vld [vmem:[%s1212] sm:$0x1]
    %v1215 = vperm.slane %v1213, 0
    %1217 = vmatpush.msra.mxu0 0.0
    %1218 = vmatpush.msra.mxu0 0.0
    %1219 = vmatpush.msra.mxu0 0.0
    %1220 = vmatpush.msra.mxu0 0.0
    %1221 = vmatpush.msra.mxu0 0.0
    %1222 = vmatpush.msra.mxu0 0.0
    %1223 = vmatpush.msra.mxu0 0.0
    %1224 = vmatpush.msra.mxu0 0.0
    %1225 = vmatpush.msra.mxu0 0.0
    %1226 = vmatpush.msra.mxu0 0.0
    %1227 = vmatpush.msra.mxu0 0.0
    %1228 = vmatpush.msra.mxu0 0.0
    %1229 = vmatpush.msra.mxu0 %v1211
    %1230 = vmatpush.msra.mxu0 %v1210
    %1231 = vmatpush.msra.mxu0 %v1209
    %1232 = vmatpush.msra.mxu0 %v1208
    %1233 = vmatmul.f32.gmra.mxu0 %v1146
    %v1234 = vpop.f32.mrf.mxu0
    %v1235 = vadd.f32 %v1215, %v1234
    %1236 = vmatmul.f32.gmra.mxu0 %v1149
    %v1237 = vpop.f32.mrf.mxu0
    %v1238 = vadd.f32 %v1215, %v1237
    %1239 = vdwg.mxu0
    %v1241 = vsel %vm460, %v1169, 0
    %v1244 = vsel %vm460, %v1172, 0
    %v1247 = vsel %vm460, %v1202, 0
    %v1250 = vsel %vm460, %v1205, 0
    %1252 = vmatpush.xpose.msra.mxu0 0.0
    %1253 = vmatpush.xpose.msra.mxu0 0.0
    %1254 = vmatpush.xpose.msra.mxu0 0.0
    %1255 = vmatpush.xpose.msra.mxu0 0.0
    %1256 = vmatpush.xpose.msra.mxu0 0.0
    %1257 = vmatpush.xpose.msra.mxu0 0.0
    %1258 = vmatpush.xpose.msra.mxu0 0.0
    %1259 = vmatpush.xpose.msra.mxu0 0.0
    %1260 = vmatpush.xpose.msra.mxu0 0.0
    %1261 = vmatpush.xpose.msra.mxu0 0.0
    %1262 = vmatpush.xpose.msra.mxu0 0.0
    %1263 = vmatpush.xpose.msra.mxu0 0.0
    %1264 = vmatpush.xpose.msra.mxu0 0.0
    %1265 = vmatpush.xpose.msra.mxu0 0.0
    %1266 = vmatpush.xpose.msra.mxu0 %v1250
    %1267 = vmatpush.xpose.msra.mxu0 %v1247
    %1268 = vmatmul.f32.gmra.mxu0 %v1241
    %v1269 = vpop.f32.mrf.mxu0
    %v1270 = vadd.f32 0.0, %v1269
    %1271 = vmatmul.f32.gmra.mxu0 %v1244
    %v1272 = vpop.f32.mrf.mxu0
    %v1273 = vadd.f32 0.0, %v1272
    %1274 = vdwg.mxu0
    %v1275 = vmul.f32 %v1270, 0.35355338
    %v1276 = vmul.f32 %v1273, 0.35355338
    %v1277 = vadd.f32 %v1275, %v359
    %v1278 = vadd.f32 %v1276, %v360
    %v1279 = vsel %vm500, %v1277, -inf
    %1280 = vmax.xlane.f32.xlu0 %v1279
    %v1281 = vpop.xlane.xlu0 %1280
    %v1282 = vsel %vm500, %v1278, -inf
    %1283 = vmax.xlane.f32.xlu0 %v1282
    %v1284 = vpop.xlane.xlu0 %1283
    %v1285 = vsub.f32 %v1277, %v1281
    %v1286 = vsub.f32 %v1278, %v1284
    %v1287 = vmul.f32 %v1285, 1.442695
    %v1288 = vpow.pop %v1287
    %v1289 = vmul.f32 %v1286, 1.442695
    %v1290 = vpow.pop %v1289
    %v1291 = vsel %vm500, %v1288, 0.0
    %1292 = vadd.xlane.f32.xlu0 %v1291
    %v1293 = vpop.xlane.xlu0 %1292
    %v1294 = vsel %vm500, %v1290, 0.0
    %1295 = vadd.xlane.f32.xlu0 %v1294
    %v1296 = vpop.xlane.xlu0 %1295
    %v1297 = vrcp.pop %v1293
    %v1298 = vrcp.pop %v1296
    %v1299 = vmul.f32 %v1288, %v1297
    %v1300 = vmul.f32 %v1290, %v1298
    %v1302 = vsel %vm500, %v1299, 0
    %v1305 = vsel %vm500, %v1300, 0
    %1307 = vmatpush.msra.mxu0 0.0
    %1308 = vmatpush.msra.mxu0 0.0
    %1309 = vmatpush.msra.mxu0 0.0
    %1310 = vmatpush.msra.mxu0 0.0
    %1311 = vmatpush.msra.mxu0 0.0
    %1312 = vmatpush.msra.mxu0 0.0
    %1313 = vmatpush.msra.mxu0 0.0
    %1314 = vmatpush.msra.mxu0 0.0
    %1315 = vmatpush.msra.mxu0 0.0
    %1316 = vmatpush.msra.mxu0 0.0
    %1317 = vmatpush.msra.mxu0 0.0
    %1318 = vmatpush.msra.mxu0 0.0
    %1319 = vmatpush.msra.mxu0 0.0
    %1320 = vmatpush.msra.mxu0 0.0
    %1321 = vmatpush.msra.mxu0 %v1238
    %1322 = vmatpush.msra.mxu0 %v1235
    %1323 = vmatmul.f32.gmra.mxu0 %v1302
    %v1324 = vpop.f32.mrf.mxu0
    %v1325 = vadd.f32 0.0, %v1324
    %1326 = vmatmul.f32.gmra.mxu0 %v1305
    %v1327 = vpop.f32.mrf.mxu0
    %v1328 = vadd.f32 0.0, %v1327
    %1329 = vdwg.mxu0
    %1330 = vrot.lane.b32.xlu0 %v1169, 120
    %v1331 = vpop.permute.xlu0 %1330
    %1332 = vrot.lane.b32.xlu0 %v1172, 120
    %v1333 = vpop.permute.xlu0 %1332
    %1334 = vrot.lane.b32.xlu0 %v1202, 120
    %v1335 = vpop.permute.xlu0 %1334
    %1336 = vrot.lane.b32.xlu0 %v1205, 120
    %v1337 = vpop.permute.xlu0 %1336
    %v1338 = vsel %vm460, %v1331, 0
    %v1340 = vsel %vm460, %v1333, 0
    %v1342 = vsel %vm460, %v1335, 0
    %v1344 = vsel %vm460, %v1337, 0
    %1346 = vmatpush.xpose.msra.mxu0 0.0
    %1347 = vmatpush.xpose.msra.mxu0 0.0
    %1348 = vmatpush.xpose.msra.mxu0 0.0
    %1349 = vmatpush.xpose.msra.mxu0 0.0
    %1350 = vmatpush.xpose.msra.mxu0 0.0
    %1351 = vmatpush.xpose.msra.mxu0 0.0
    %1352 = vmatpush.xpose.msra.mxu0 0.0
    %1353 = vmatpush.xpose.msra.mxu0 0.0
    %1354 = vmatpush.xpose.msra.mxu0 0.0
    %1355 = vmatpush.xpose.msra.mxu0 0.0
    %1356 = vmatpush.xpose.msra.mxu0 0.0
    %1357 = vmatpush.xpose.msra.mxu0 0.0
    %1358 = vmatpush.xpose.msra.mxu0 0.0
    %1359 = vmatpush.xpose.msra.mxu0 0.0
    %1360 = vmatpush.xpose.msra.mxu0 %v1344
    %1361 = vmatpush.xpose.msra.mxu0 %v1342
    %1362 = vmatmul.f32.gmra.mxu0 %v1338
    %v1363 = vpop.f32.mrf.mxu0
    %v1364 = vadd.f32 0.0, %v1363
    %1365 = vmatmul.f32.gmra.mxu0 %v1340
    %v1366 = vpop.f32.mrf.mxu0
    %v1367 = vadd.f32 0.0, %v1366
    %1368 = vdwg.mxu0
    %v1369 = vmul.f32 %v1364, 0.35355338
    %v1370 = vmul.f32 %v1367, 0.35355338
    %v1371 = vadd.f32 %v1369, %v359
    %v1372 = vadd.f32 %v1370, %v360
    %v1373 = vsel %vm500, %v1371, -inf
    %1374 = vmax.xlane.f32.xlu0 %v1373
    %v1375 = vpop.xlane.xlu0 %1374
    %v1376 = vsel %vm500, %v1372, -inf
    %1377 = vmax.xlane.f32.xlu0 %v1376
    %v1378 = vpop.xlane.xlu0 %1377
    %v1379 = vsub.f32 %v1371, %v1375
    %v1380 = vsub.f32 %v1372, %v1378
    %v1381 = vmul.f32 %v1379, 1.442695
    %v1382 = vpow.pop %v1381
    %v1383 = vmul.f32 %v1380, 1.442695
    %v1384 = vpow.pop %v1383
    %v1385 = vsel %vm500, %v1382, 0.0
    %1386 = vadd.xlane.f32.xlu0 %v1385
    %v1387 = vpop.xlane.xlu0 %1386
    %v1388 = vsel %vm500, %v1384, 0.0
    %1389 = vadd.xlane.f32.xlu0 %v1388
    %v1390 = vpop.xlane.xlu0 %1389
    %v1391 = vrcp.pop %v1387
    %v1392 = vrcp.pop %v1390
    %v1393 = vmul.f32 %v1382, %v1391
    %v1394 = vmul.f32 %v1384, %v1392
    %1397 = vrot.lane.b32.xlu0 %v1235, 120
    %v1398 = vpop.permute.xlu0 %1397
    %1399 = vrot.lane.b32.xlu0 %v1238, 120
    %v1400 = vpop.permute.xlu0 %1399
    %v1404 = vsel %vm500, %v1393, 0
    %v1407 = vsel %vm500, %v1394, 0
    %1409 = vmatpush.msra.mxu0 0.0
    %1410 = vmatpush.msra.mxu0 0.0
    %1411 = vmatpush.msra.mxu0 0.0
    %1412 = vmatpush.msra.mxu0 0.0
    %1413 = vmatpush.msra.mxu0 0.0
    %1414 = vmatpush.msra.mxu0 0.0
    %1415 = vmatpush.msra.mxu0 0.0
    %1416 = vmatpush.msra.mxu0 0.0
    %1417 = vmatpush.msra.mxu0 0.0
    %1418 = vmatpush.msra.mxu0 0.0
    %1419 = vmatpush.msra.mxu0 0.0
    %1420 = vmatpush.msra.mxu0 0.0
    %1421 = vmatpush.msra.mxu0 0.0
    %1422 = vmatpush.msra.mxu0 0.0
    %1423 = vmatpush.msra.mxu0 %v1400
    %1424 = vmatpush.msra.mxu0 %v1398
    %1425 = vmatmul.f32.gmra.mxu0 %v1404
    %v1426 = vpop.f32.mrf.mxu0
    %v1427 = vadd.f32 0.0, %v1426
    %1428 = vmatmul.f32.gmra.mxu0 %v1407
    %v1429 = vpop.f32.mrf.mxu0
    %v1430 = vadd.f32 0.0, %v1429
    %1431 = vdwg.mxu0
    %1432 = vrot.lane.b32.xlu0 %v1169, 112
    %v1433 = vpop.permute.xlu0 %1432
    %1434 = vrot.lane.b32.xlu0 %v1172, 112
    %v1435 = vpop.permute.xlu0 %1434
    %1436 = vrot.lane.b32.xlu0 %v1202, 112
    %v1437 = vpop.permute.xlu0 %1436
    %1438 = vrot.lane.b32.xlu0 %v1205, 112
    %v1439 = vpop.permute.xlu0 %1438
    %v1440 = vsel %vm460, %v1433, 0
    %v1442 = vsel %vm460, %v1435, 0
    %v1444 = vsel %vm460, %v1437, 0
    %v1446 = vsel %vm460, %v1439, 0
    %1448 = vmatpush.xpose.msra.mxu0 0.0
    %1449 = vmatpush.xpose.msra.mxu0 0.0
    %1450 = vmatpush.xpose.msra.mxu0 0.0
    %1451 = vmatpush.xpose.msra.mxu0 0.0
    %1452 = vmatpush.xpose.msra.mxu0 0.0
    %1453 = vmatpush.xpose.msra.mxu0 0.0
    %1454 = vmatpush.xpose.msra.mxu0 0.0
    %1455 = vmatpush.xpose.msra.mxu0 0.0
    %1456 = vmatpush.xpose.msra.mxu0 0.0
    %1457 = vmatpush.xpose.msra.mxu0 0.0
    %1458 = vmatpush.xpose.msra.mxu0 0.0
    %1459 = vmatpush.xpose.msra.mxu0 0.0
    %1460 = vmatpush.xpose.msra.mxu0 0.0
    %1461 = vmatpush.xpose.msra.mxu0 0.0
    %1462 = vmatpush.xpose.msra.mxu0 %v1446
    %1463 = vmatpush.xpose.msra.mxu0 %v1444
    %1464 = vmatmul.f32.gmra.mxu0 %v1440
    %v1465 = vpop.f32.mrf.mxu0
    %v1466 = vadd.f32 0.0, %v1465
    %1467 = vmatmul.f32.gmra.mxu0 %v1442
    %v1468 = vpop.f32.mrf.mxu0
    %v1469 = vadd.f32 0.0, %v1468
    %1470 = vdwg.mxu0
    %v1471 = vmul.f32 %v1466, 0.35355338
    %v1472 = vmul.f32 %v1469, 0.35355338
    %v1473 = vadd.f32 %v1471, %v359
    %v1474 = vadd.f32 %v1472, %v360
    %v1475 = vsel %vm500, %v1473, -inf
    %1476 = vmax.xlane.f32.xlu0 %v1475
    %v1477 = vpop.xlane.xlu0 %1476
    %v1478 = vsel %vm500, %v1474, -inf
    %1479 = vmax.xlane.f32.xlu0 %v1478
    %v1480 = vpop.xlane.xlu0 %1479
    %v1481 = vsub.f32 %v1473, %v1477
    %v1482 = vsub.f32 %v1474, %v1480
    %v1483 = vmul.f32 %v1481, 1.442695
    %v1484 = vpow.pop %v1483
    %v1485 = vmul.f32 %v1482, 1.442695
    %v1486 = vpow.pop %v1485
    %v1487 = vsel %vm500, %v1484, 0.0
    %1488 = vadd.xlane.f32.xlu0 %v1487
    %v1489 = vpop.xlane.xlu0 %1488
    %v1490 = vsel %vm500, %v1486, 0.0
    %1491 = vadd.xlane.f32.xlu0 %v1490
    %v1492 = vpop.xlane.xlu0 %1491
    %v1493 = vrcp.pop %v1489
    %v1494 = vrcp.pop %v1492
    %v1495 = vmul.f32 %v1484, %v1493
    %v1496 = vmul.f32 %v1486, %v1494
    %1497 = vrot.lane.b32.xlu0 %v1235, 112
    %v1498 = vpop.permute.xlu0 %1497
    %1499 = vrot.lane.b32.xlu0 %v1238, 112
    %v1500 = vpop.permute.xlu0 %1499
    %v1504 = vsel %vm500, %v1495, 0
    %v1507 = vsel %vm500, %v1496, 0
    %1509 = vmatpush.msra.mxu0 0.0
    %1510 = vmatpush.msra.mxu0 0.0
    %1511 = vmatpush.msra.mxu0 0.0
    %1512 = vmatpush.msra.mxu0 0.0
    %1513 = vmatpush.msra.mxu0 0.0
    %1514 = vmatpush.msra.mxu0 0.0
    %1515 = vmatpush.msra.mxu0 0.0
    %1516 = vmatpush.msra.mxu0 0.0
    %1517 = vmatpush.msra.mxu0 0.0
    %1518 = vmatpush.msra.mxu0 0.0
    %1519 = vmatpush.msra.mxu0 0.0
    %1520 = vmatpush.msra.mxu0 0.0
    %1521 = vmatpush.msra.mxu0 0.0
    %1522 = vmatpush.msra.mxu0 0.0
    %1523 = vmatpush.msra.mxu0 %v1500
    %1524 = vmatpush.msra.mxu0 %v1498
    %1525 = vmatmul.f32.gmra.mxu0 %v1504
    %v1526 = vpop.f32.mrf.mxu0
    %v1527 = vadd.f32 0.0, %v1526
    %1528 = vmatmul.f32.gmra.mxu0 %v1507
    %v1529 = vpop.f32.mrf.mxu0
    %v1530 = vadd.f32 0.0, %v1529
    %1531 = vdwg.mxu0
    %1532 = vrot.lane.b32.xlu0 %v1169, 104
    %v1533 = vpop.permute.xlu0 %1532
    %1534 = vrot.lane.b32.xlu0 %v1172, 104
    %v1535 = vpop.permute.xlu0 %1534
    %1536 = vrot.lane.b32.xlu0 %v1202, 104
    %v1537 = vpop.permute.xlu0 %1536
    %1538 = vrot.lane.b32.xlu0 %v1205, 104
    %v1539 = vpop.permute.xlu0 %1538
    %v1540 = vsel %vm460, %v1533, 0
    %v1542 = vsel %vm460, %v1535, 0
    %v1544 = vsel %vm460, %v1537, 0
    %v1546 = vsel %vm460, %v1539, 0
    %1548 = vmatpush.xpose.msra.mxu0 0.0
    %1549 = vmatpush.xpose.msra.mxu0 0.0
    %1550 = vmatpush.xpose.msra.mxu0 0.0
    %1551 = vmatpush.xpose.msra.mxu0 0.0
    %1552 = vmatpush.xpose.msra.mxu0 0.0
    %1553 = vmatpush.xpose.msra.mxu0 0.0
    %1554 = vmatpush.xpose.msra.mxu0 0.0
    %1555 = vmatpush.xpose.msra.mxu0 0.0
    %1556 = vmatpush.xpose.msra.mxu0 0.0
    %1557 = vmatpush.xpose.msra.mxu0 0.0
    %1558 = vmatpush.xpose.msra.mxu0 0.0
    %1559 = vmatpush.xpose.msra.mxu0 0.0
    %1560 = vmatpush.xpose.msra.mxu0 0.0
    %1561 = vmatpush.xpose.msra.mxu0 0.0
    %1562 = vmatpush.xpose.msra.mxu0 %v1546
    %1563 = vmatpush.xpose.msra.mxu0 %v1544
    %1564 = vmatmul.f32.gmra.mxu0 %v1540
    %v1565 = vpop.f32.mrf.mxu0
    %v1566 = vadd.f32 0.0, %v1565
    %1567 = vmatmul.f32.gmra.mxu0 %v1542
    %v1568 = vpop.f32.mrf.mxu0
    %v1569 = vadd.f32 0.0, %v1568
    %1570 = vdwg.mxu0
    %v1571 = vmul.f32 %v1566, 0.35355338
    %v1572 = vmul.f32 %v1569, 0.35355338
    %v1573 = vadd.f32 %v1571, %v359
    %v1574 = vadd.f32 %v1572, %v360
    %v1575 = vsel %vm500, %v1573, -inf
    %1576 = vmax.xlane.f32.xlu0 %v1575
    %v1577 = vpop.xlane.xlu0 %1576
    %v1578 = vsel %vm500, %v1574, -inf
    %1579 = vmax.xlane.f32.xlu0 %v1578
    %v1580 = vpop.xlane.xlu0 %1579
    %v1581 = vsub.f32 %v1573, %v1577
    %v1582 = vsub.f32 %v1574, %v1580
    %v1583 = vmul.f32 %v1581, 1.442695
    %v1584 = vpow.pop %v1583
    %v1585 = vmul.f32 %v1582, 1.442695
    %v1586 = vpow.pop %v1585
    %v1587 = vsel %vm500, %v1584, 0.0
    %1588 = vadd.xlane.f32.xlu0 %v1587
    %v1589 = vpop.xlane.xlu0 %1588
    %v1590 = vsel %vm500, %v1586, 0.0
    %1591 = vadd.xlane.f32.xlu0 %v1590
    %v1592 = vpop.xlane.xlu0 %1591
    %v1593 = vrcp.pop %v1589
    %v1594 = vrcp.pop %v1592
    %v1595 = vmul.f32 %v1584, %v1593
    %v1596 = vmul.f32 %v1586, %v1594
    %1597 = vrot.lane.b32.xlu0 %v1235, 104
    %v1598 = vpop.permute.xlu0 %1597
    %1599 = vrot.lane.b32.xlu0 %v1238, 104
    %v1600 = vpop.permute.xlu0 %1599
    %v1604 = vsel %vm500, %v1595, 0
    %v1607 = vsel %vm500, %v1596, 0
    %1609 = vmatpush.msra.mxu0 0.0
    %1610 = vmatpush.msra.mxu0 0.0
    %1611 = vmatpush.msra.mxu0 0.0
    %1612 = vmatpush.msra.mxu0 0.0
    %1613 = vmatpush.msra.mxu0 0.0
    %1614 = vmatpush.msra.mxu0 0.0
    %1615 = vmatpush.msra.mxu0 0.0
    %1616 = vmatpush.msra.mxu0 0.0
    %1617 = vmatpush.msra.mxu0 0.0
    %1618 = vmatpush.msra.mxu0 0.0
    %1619 = vmatpush.msra.mxu0 0.0
    %1620 = vmatpush.msra.mxu0 0.0
    %1621 = vmatpush.msra.mxu0 0.0
    %1622 = vmatpush.msra.mxu0 0.0
    %1623 = vmatpush.msra.mxu0 %v1600
    %1624 = vmatpush.msra.mxu0 %v1598
    %1625 = vmatmul.f32.gmra.mxu0 %v1604
    %v1626 = vpop.f32.mrf.mxu0
    %v1627 = vadd.f32 0.0, %v1626
    %1628 = vmatmul.f32.gmra.mxu0 %v1607
    %v1629 = vpop.f32.mrf.mxu0
    %v1630 = vadd.f32 0.0, %v1629
    %1631 = vdwg.mxu0
    %1634 = vrot.lane.b32.xlu0 %v1427, 8
    %v1635 = vpop.permute.xlu0 %1634
    %1636 = vrot.lane.b32.xlu0 %v1430, 8
    %v1637 = vpop.permute.xlu0 %1636
    %1642 = vrot.lane.b32.xlu0 %v1527, 16
    %v1643 = vpop.permute.xlu0 %1642
    %1644 = vrot.lane.b32.xlu0 %v1530, 16
    %v1645 = vpop.permute.xlu0 %1644
    %1650 = vrot.lane.b32.xlu0 %v1627, 24
    %v1651 = vpop.permute.xlu0 %1650
    %1652 = vrot.lane.b32.xlu0 %v1630, 24
    %v1653 = vpop.permute.xlu0 %1652
    %v1656 = vsel %vm460, %v1325, %v1635
    %v1657 = vsel %vm460, %v1328, %v1637
    %v1658 = vsel %vm500, %v1656, %v1643
    %v1659 = vsel %vm500, %v1657, %v1645
    %v1660 = vsel %vm882, %v1658, %v1651
    %v1661 = vsel %vm882, %v1659, %v1653
    %s1662 = scalar_lea.vmem [#allocation13], 32
    %v1663 = vld [vmem:[%s1662] sm:$0xff]
    %v1664 = vld [vmem:[%s1662 + $0x8] sm:$0xff]
    %v1665 = vld [vmem:[%s1662 + $0x10] sm:$0xff]
    %v1666 = vld [vmem:[%s1662 + $0x18] sm:$0xff]
    %s1667 = scalar_lea.vmem [#allocation14], 1
    %v1668 = vld [vmem:[%s1667] sm:$0x1]
    %v1670 = vperm.slane %v1668, 0
    %v1673 = vsel %vm297, %v1660, 0
    %v1676 = vsel %vm297, %v1661, 0
    %1678 = vmatpush.msra.mxu0 0.0
    %1679 = vmatpush.msra.mxu0 0.0
    %1680 = vmatpush.msra.mxu0 0.0
    %1681 = vmatpush.msra.mxu0 0.0
    %1682 = vmatpush.msra.mxu0 0.0
    %1683 = vmatpush.msra.mxu0 0.0
    %1684 = vmatpush.msra.mxu0 0.0
    %1685 = vmatpush.msra.mxu0 0.0
    %1686 = vmatpush.msra.mxu0 0.0
    %1687 = vmatpush.msra.mxu0 0.0
    %1688 = vmatpush.msra.mxu0 0.0
    %1689 = vmatpush.msra.mxu0 0.0
    %1690 = vmatpush.msra.mxu0 %v1666
    %1691 = vmatpush.msra.mxu0 %v1665
    %1692 = vmatpush.msra.mxu0 %v1664
    %1693 = vmatpush.msra.mxu0 %v1663
    %1694 = vmatmul.f32.gmra.mxu0 %v1673
    %v1695 = vpop.f32.mrf.mxu0
    %v1696 = vadd.f32 %v1670, %v1695
    %1697 = vmatmul.f32.gmra.mxu0 %v1676
    %v1698 = vpop.f32.mrf.mxu0
    %v1699 = vadd.f32 %v1670, %v1698
    %1700 = vdwg.mxu0
    %v1701 = vadd.f32 %v1133, %v1696
    %v1702 = vadd.f32 %v1134, %v1699
    %s1703 = scalar_lea.vmem [#allocation16], 1
    %v1704 = vld [vmem:[%s1703] sm:$0x1]
    %s1705 = scalar_lea.vmem [#allocation17], 1
    %v1706 = vld [vmem:[%s1705] sm:$0x1]
    %v1707 = vsel %vm297, %v1701, 0.0
    %1708 = vadd.xlane.f32.xlu0 %v1707
    %v1709 = vpop.xlane.xlu0 %1708
    %v1710 = vsel %vm297, %v1702, 0.0
    %1711 = vadd.xlane.f32.xlu0 %v1710
    %v1712 = vpop.xlane.xlu0 %1711
    %v1713 = vmul.f32 %v1709, %v310
    %v1714 = vmul.f32 %v1712, %v310
    %v1715 = vsub.f32 %v1701, %v1713
    %v1716 = vsub.f32 %v1702, %v1714
    %v1717 = vmul.f32 %v1715, %v1715
    %v1718 = vmul.f32 %v1716, %v1716
    %v1719 = vsel %vm297, %v1717, 0.0
    %1720 = vadd.xlane.f32.xlu0 %v1719
    %v1721 = vpop.xlane.xlu0 %1720
    %v1722 = vsel %vm297, %v1718, 0.0
    %1723 = vadd.xlane.f32.xlu0 %v1722
    %v1724 = vpop.xlane.xlu0 %1723
    %v1725 = vmul.f32 %v1721, %v310
    %v1726 = vmul.f32 %v1724, %v310
    %v1727 = vadd.f32 %v1725, 1e-12
    %v1728 = vadd.f32 %v1726, 1e-12
    %v1729 = vrsqrt.pop %v1727
    %v1730 = vmul.f32 %v1729, %v1727
    %v1731 = vmul.f32 %v1730, %v1729
    %v1732 = vmul.f32 0.5, %v1731
    %v1733 = vsub.f32 1.5, %v1732
    %v1734 = vmul.f32 %v1729, %v1733
    %vm1735 = vweird.f32 %v1727
    %vm1736 = vweird.f32 %v1729
    %vm1737 = vmor %vm1735, %vm1736
    %v1738 = vsel %vm1737, %v1729, %v1734
    %v1739 = vrsqrt.pop %v1728
    %v1740 = vmul.f32 %v1739, %v1728
    %v1741 = vmul.f32 %v1740, %v1739
    %v1742 = vmul.f32 0.5, %v1741
    %v1743 = vsub.f32 1.5, %v1742
    %v1744 = vmul.f32 %v1739, %v1743
    %vm1745 = vweird.f32 %v1728
    %vm1746 = vweird.f32 %v1739
    %vm1747 = vmor %vm1745, %vm1746
    %v1748 = vsel %vm1747, %v1739, %v1744
    %v1749 = vmul.f32 %v1715, %v1738
    %v1750 = vmul.f32 %v1716, %v1748
    %v1752 = vperm.slane %v1704, 0
    %v1754 = vmul.f32 %v1749, %v1752
    %v1755 = vmul.f32 %v1750, %v1752
    %v1757 = vperm.slane %v1706, 0
    %v1759 = vadd.f32 %v1754, %v1757
    %v1760 = vadd.f32 %v1755, %v1757
    %s1761 = scalar_lea.vmem [#allocation19], 32
    %v1762 = vld [vmem:[%s1761] sm:$0xff]
    %v1763 = vld [vmem:[%s1761 + $0x8] sm:$0xff]
    %v1764 = vld [vmem:[%s1761 + $0x10] sm:$0xff]
    %v1765 = vld [vmem:[%s1761 + $0x18] sm:$0xff]
    %s1766 = scalar_lea.vmem [#allocation20], 1
    %v1767 = vld [vmem:[%s1766] sm:$0x1]
    %v1769 = vperm.slane %v1767, 0
    %v1772 = vsel %vm297, %v1759, 0
    %v1775 = vsel %vm297, %v1760, 0
    %1777 = vmatpush.msra.mxu0 0.0
    %1778 = vmatpush.msra.mxu0 0.0
    %1779 = vmatpush.msra.mxu0 0.0
    %1780 = vmatpush.msra.mxu0 0.0
    %1781 = vmatpush.msra.mxu0 0.0
    %1782 = vmatpush.msra.mxu0 0.0
    %1783 = vmatpush.msra.mxu0 0.0
    %1784 = vmatpush.msra.mxu0 0.0
    %1785 = vmatpush.msra.mxu0 0.0
    %1786 = vmatpush.msra.mxu0 0.0
    %1787 = vmatpush.msra.mxu0 0.0
    %1788 = vmatpush.msra.mxu0 0.0
    %1789 = vmatpush.msra.mxu0 %v1765
    %1790 = vmatpush.msra.mxu0 %v1764
    %1791 = vmatpush.msra.mxu0 %v1763
    %1792 = vmatpush.msra.mxu0 %v1762
    %1793 = vmatmul.f32.gmra.mxu0 %v1772
    %v1794 = vpop.f32.mrf.mxu0
    %v1795 = vadd.f32 %v1769, %v1794
    %1796 = vmatmul.f32.gmra.mxu0 %v1775
    %v1797 = vpop.f32.mrf.mxu0
    %v1798 = vadd.f32 %v1769, %v1797
    %1799 = vdwg.mxu0
    %v1800 = vmul.f32 %v1795, 0.5
    %v1801 = vmul.f32 %v1798, 0.5
    %v1802 = vmul.f32 %v1795, 0.044715
    %v1803 = vmul.f32 %v1798, 0.044715
    %v1804 = vmul.f32 %v1802, %v1795
    %v1805 = vmul.f32 %v1803, %v1798
    %v1806 = vmul.f32 %v1804, %v1795
    %v1807 = vmul.f32 %v1805, %v1798
    %v1808 = vadd.f32 %v1795, %v1806
    %v1809 = vadd.f32 %v1798, %v1807
    %v1810 = vmul.f32 %v1808, 0.7978846
    %v1811 = vmul.f32 %v1809, 0.7978846
    %v1812 = vtanh.pop %v1810
    %v1813 = vtanh.pop %v1811
    %v1814 = vadd.f32 %v1812, 1.0
    %v1815 = vadd.f32 %v1813, 1.0
    %v1816 = vmul.f32 %v1800, %v1814
    %v1817 = vmul.f32 %v1801, %v1815
    %s1818 = scalar_lea.vmem %s16, 64
    %v1819 = vld [vmem:[%s1818] sm:$0xff]
    %v1820 = vld [vmem:[%s1818 + $0x8] sm:$0xff]
    %v1821 = vld [vmem:[%s1818 + $0x10] sm:$0xff]
    %v1822 = vld [vmem:[%s1818 + $0x18] sm:$0xff]
    %v1823 = vld [vmem:[%s1818 + $0x20] sm:$0xff]
    %v1824 = vld [vmem:[%s1818 + $0x28] sm:$0xff]
    %v1825 = vld [vmem:[%s1818 + $0x30] sm:$0xff]
    %v1826 = vld [vmem:[%s1818 + $0x38] sm:$0xff]
    %s1827 = scalar_lea.vmem [#allocation22], 1
    %v1828 = vld [vmem:[%s1827] sm:$0x1]
    %v1830 = vperm.slane %v1828, 0
    %v1833 = vsel %vm1047, %v1816, 0
    %v1836 = vsel %vm1047, %v1817, 0
    %1838 = vmatpush.msra.mxu0 0.0
    %1839 = vmatpush.msra.mxu0 0.0
    %1840 = vmatpush.msra.mxu0 0.0
    %1841 = vmatpush.msra.mxu0 0.0
    %1842 = vmatpush.msra.mxu0 0.0
    %1843 = vmatpush.msra.mxu0 0.0
    %1844 = vmatpush.msra.mxu0 0.0
    %1845 = vmatpush.msra.mxu0 0.0
    %1846 = vmatpush.msra.mxu0 %v1826
    %1847 = vmatpush.msra.mxu0 %v1825
    %1848 = vmatpush.msra.mxu0 %v1824
    %1849 = vmatpush.msra.mxu0 %v1823
    %1850 = vmatpush.msra.mxu0 %v1822
    %1851 = vmatpush.msra.mxu0 %v1821
    %1852 = vmatpush.msra.mxu0 %v1820
    %1853 = vmatpush.msra.mxu0 %v1819
    %1854 = vmatmul.f32.gmra.mxu0 %v1833
    %v1855 = vpop.f32.mrf.mxu0
    %v1856 = vadd.f32 %v1830, %v1855
    %1857 = vmatmul.f32.gmra.mxu0 %v1836
    %v1858 = vpop.f32.mrf.mxu0
    %v1859 = vadd.f32 %v1830, %v1858
    %1860 = vdwg.mxu0
    %v1861 = vadd.f32 %v1759, %v1856
    %v1862 = vadd.f32 %v1760, %v1859
    %s1863 = scalar_lea.vmem [#allocation23], 1
    %v1864 = vld [vmem:[%s1863] sm:$0x1]
    %s1865 = scalar_lea.vmem %s19, 1
    %v1866 = vld [vmem:[%s1865] sm:$0x1]
    %v1867 = vsel %vm297, %v1861, 0.0
    %1868 = vadd.xlane.f32.xlu0 %v1867
    %v1869 = vpop.xlane.xlu0 %1868
    %v1870 = vsel %vm297, %v1862, 0.0
    %1871 = vadd.xlane.f32.xlu0 %v1870
    %v1872 = vpop.xlane.xlu0 %1871
    %v1873 = vmul.f32 %v1869, %v310
    %v1874 = vmul.f32 %v1872, %v310
    %v1875 = vsub.f32 %v1861, %v1873
    %v1876 = vsub.f32 %v1862, %v1874
    %v1877 = vmul.f32 %v1875, %v1875
    %v1878 = vmul.f32 %v1876, %v1876
    %v1879 = vsel %vm297, %v1877, 0.0
    %1880 = vadd.xlane.f32.xlu0 %v1879
    %v1881 = vpop.xlane.xlu0 %1880
    %v1882 = vsel %vm297, %v1878, 0.0
    %1883 = vadd.xlane.f32.xlu0 %v1882
    %v1884 = vpop.xlane.xlu0 %1883
    %v1885 = vmul.f32 %v1881, %v310
    %v1886 = vmul.f32 %v1884, %v310
    %v1887 = vadd.f32 %v1885, 1e-12
    %v1888 = vadd.f32 %v1886, 1e-12
    %v1889 = vrsqrt.pop %v1887
    %v1890 = vmul.f32 %v1889, %v1887
    %v1891 = vmul.f32 %v1890, %v1889
    %v1892 = vmul.f32 0.5, %v1891
    %v1893 = vsub.f32 1.5, %v1892
    %v1894 = vmul.f32 %v1889, %v1893
    %vm1895 = vweird.f32 %v1887
    %vm1896 = vweird.f32 %v1889
    %vm1897 = vmor %vm1895, %vm1896
    %v1898 = vsel %vm1897, %v1889, %v1894
    %v1899 = vrsqrt.pop %v1888
    %v1900 = vmul.f32 %v1899, %v1888
    %v1901 = vmul.f32 %v1900, %v1899
    %v1902 = vmul.f32 0.5, %v1901
    %v1903 = vsub.f32 1.5, %v1902
    %v1904 = vmul.f32 %v1899, %v1903
    %vm1905 = vweird.f32 %v1888
    %vm1906 = vweird.f32 %v1899
    %vm1907 = vmor %vm1905, %vm1906
    %v1908 = vsel %vm1907, %v1899, %v1904
    %v1909 = vmul.f32 %v1875, %v1898
    %v1910 = vmul.f32 %v1876, %v1908
    %v1912 = vperm.slane %v1864, 0
    %v1914 = vmul.f32 %v1909, %v1912
    %v1915 = vmul.f32 %v1910, %v1912
    %v1917 = vperm.slane %v1866, 0
    %v1919 = vadd.f32 %v1914, %v1917
    %v1920 = vadd.f32 %v1915, %v1917
    %v1921 = vld [vmem:[%s20] sm:$0xff]
    %v1922 = vld [vmem:[%s20 + $0x8] sm:$0xff]
    %v1923 = vld [vmem:[%s20 + $0x10] sm:$0xff]
    %v1924 = vld [vmem:[%s20 + $0x18] sm:$0xff]
    %v1925 = vld [vmem:[#allocation2] sm:$0x1]
    %v1927 = vperm.slane %v1925, 0
    %v1930 = vsel %vm297, %v1919, 0
    %v1933 = vsel %vm297, %v1920, 0
    %1935 = vmatpush.msra.mxu0 0.0
    %1936 = vmatpush.msra.mxu0 0.0
    %1937 = vmatpush.msra.mxu0 0.0
    %1938 = vmatpush.msra.mxu0 0.0
    %1939 = vmatpush.msra.mxu0 0.0
    %1940 = vmatpush.msra.mxu0 0.0
    %1941 = vmatpush.msra.mxu0 0.0
    %1942 = vmatpush.msra.mxu0 0.0
    %1943 = vmatpush.msra.mxu0 0.0
    %1944 = vmatpush.msra.mxu0 0.0
    %1945 = vmatpush.msra.mxu0 0.0
    %1946 = vmatpush.msra.mxu0 0.0
    %1947 = vmatpush.msra.mxu0 %v1924
    %1948 = vmatpush.msra.mxu0 %v1923
    %1949 = vmatpush.msra.mxu0 %v1922
    %1950 = vmatpush.msra.mxu0 %v1921
    %1951 = vmatmul.f32.gmra.mxu0 %v1930
    %v1952 = vpop.f32.mrf.mxu0
    %v1953 = vadd.f32 %v1927, %v1952
    %1954 = vmatmul.f32.gmra.mxu0 %v1933
    %v1955 = vpop.f32.mrf.mxu0
    %v1956 = vadd.f32 %v1927, %v1955
    %1957 = vdwg.mxu0
    %v1958 = vadd.f32 %v1953, 0.0
    %v1959 = vadd.f32 %v1958, %v1956
    %v1960 = vrcp.pop 2.0
    %v1961 = vmul.f32 2.0, %v1960
    %v1962 = vsub.f32 1.0, %v1961
    %v1963 = vmul.f32 %v1960, %v1962
    %v1964 = vadd.f32 %v1960, %v1963
    %vm1965 = vweird.f32 %v1960
    %v1966 = vsel %vm1965, %v1960, %v1964
    %v1967 = vmul.f32 %v1959, %v1966
    %v1968 = vsub.f32 %v1953, %v1967
    %v1969 = vmul.f32 %v1968, %v1968
    %v1970 = vadd.f32 %v1969, 0.0
    %v1971 = vsub.f32 %v1956, %v1967
    %v1972 = vmul.f32 %v1971, %v1971
    %v1973 = vadd.f32 %v1970, %v1972
    %v1974 = vmul.f32 %v1973, %v1966
    %v1975 = vadd.f32 %v1974, 1e-05
    %v1976 = vrsqrt.pop %v1975
    %v1977 = vmul.f32 %v1976, %v1975
    %v1978 = vmul.f32 %v1977, %v1976
    %v1979 = vmul.f32 0.5, %v1978
    %v1980 = vsub.f32 1.5, %v1979
    %v1981 = vmul.f32 %v1976, %v1980
    %vm1982 = vweird.f32 %v1975
    %vm1983 = vweird.f32 %v1976
    %vm1984 = vmor %vm1982, %vm1983
    %v1985 = vsel %vm1984, %v1976, %v1981
    %v1986 = vld [vmem:[%s22] sm:$0xff]
    %v1987 = vld [vmem:[%s23] sm:$0xff]
    %v1988 = vmul.f32 %v1968, %v1985
    %v1989 = vmul.f32 %v1988, %v1986
    %v1990 = vadd.f32 %v1989, %v1987
    %vm1991 = vcmask 7168
    %1992 = vst.msk [vmem:[%s24] sm:$0xff] %vm1991, %v1990
    %v1993 = vmul.f32 %v1971, %v1985
    %v1994 = vmul.f32 %v1993, %v1986
    %v1995 = vadd.f32 %v1994, %v1987
    %s1996 = scalar_lea.vmem %s24, 8
    %1997 = vst.msk [vmem:[%s1996] sm:$0xff] %vm1991, %v1995
    // Predicated region
    $region154: #{tpu_custom_call.1} parent=1 // pred_check
      _
    $region155: #{tpu_custom_call.1} parent=1 // pred_check_branch
      %1999 = sbr.rel (0) target = $region157
    $region156: #{tpu_custom_call.1} parent=1 // pred_region
      _
    $region157: #{tpu_custom_call.1} parent=1 // pred_fallthru
      _
    // Predicated region
    $region158: #{tpu_custom_call.1} parent=1 // pred_check
      _
    $region159: #{tpu_custom_call.1} parent=1 // pred_check_branch
      %2001 = sbr.rel (0) target = $region161
    $region160: #{tpu_custom_call.1} parent=1 // pred_region
      _
    $region161: #{tpu_custom_call.1} parent=1 // pred_fallthru
      _
    %2002 = vsyncpa [#allocation4], 1
    %2003 = vsyncpa [#allocation6], 1
    %2004 = vsyncpa [#allocation9], 1
    %2005 = vsyncpa [#allocation12], 1
    %2006 = vsyncpa [#allocation15], 1
    %2007 = vsyncpa [#allocation18], 1
    %2008 = vsyncpa [#allocation21], 1
    %2009 = vsyncpa [#allocation24], 1

</llo_original>
